<compile_context>
chip_gen: v5e
topology: v5e:2x2
jax: 0.10.0
libtpu: 0.0.40
codegen_flags: <defaults>
</compile_context>

<pallas_src>
import math

import numpy as np

import jax
import jax.numpy as jnp
from jax import lax
from jax.experimental import pallas as pl
from jax.experimental.pallas import tpu as pltpu  # noqa: F401  (kept for parity with template)


# ---- static problem dimensions (implied by the module + its input shape) ----
N, CIN = 2, 3                  # batch, input channels
H, W = 22, 11                  # spatial dims after squeezing the singleton depth
HP, WP = H - 2, W - 2          # 20, 9   after MaxPool2d(3, stride=1)
L1 = HP * WP                   # 180     Conv1d input length (flattened HP*WP)
C1, C2 = 18, 64                # conv output channel counts
K = 3                          # conv kernel taps
L2 = (L1 + 2 - K) // 2 + 1     # 90      Conv1d(stride=2, pad=1) output length
PH = (C2 - 3) // 2 + 1         # 31      AvgPool2d(3, s=2) output rows
PW = (L2 - 3) // 2 + 1         # 44      AvgPool2d(3, s=2) output cols

FLAT = H * W                   # 242     flattened raw image length per (b, c)
LPOOL = W * (HP - 1) + WP      # 218     flat-index range that holds every pooled pos
NL2 = N * L2                   # 180     batch-folded conv length
NPW = N * PW                   # 88      batch-folded pooled width

assert L1 == 2 * L2            # stride-2 + pad-1 covers the whole input exactly
assert LPOOL == W * (HP - 1) + (WP - 1) + 1


# ------------------ precomputed constant operands (NumPy) --------------------
# Built once at import time; inside jit they are constants (no per-call VALU
# mask building in the kernel -- review item #2).

def _build_sel():
    # Fused "flatten (h,w)->l" + "stride-2, pad-1, per-tap gather" selection:
    # SEL[l, k*L2 + j] = 1  iff  l == W*h + w  with  (h, w) = divmod(2j + k - 1, WP)
    # and 0 <= 2j+k-1 < L1 (the single pad position m = -1 yields an all-zero
    # column, i.e. zero padding).  Applied per batch (batch lives on sublanes).
    sel = np.zeros((LPOOL, K * L2), np.float32)
    for k in range(K):
        for j in range(L2):
            m = 2 * j + k - 1
            if 0 <= m < L1:
                h, w = divmod(m, WP)
                sel[W * h + w, k * L2 + j] = 1.0
    return sel


def _build_pool_cols():
    # Block-diagonal (per batch) banded 1/3 averaging over the length axis,
    # stride-2 windows only: POOLC[b*L2 + i, b*PW + t] = 1/3 if 0 <= i-2t <= 2.
    pc = np.zeros((NL2, NPW), np.float32)
    for b in range(N):
        for t in range(PW):
            for d in range(3):
                pc[b * L2 + 2 * t + d, b * PW + t] = 1.0 / 3.0
    return pc


def _build_pool_rows():
    # Banded 1/3 averaging over the channel axis (stride-2 windows).
    pr = np.zeros((PH, C2), np.float32)
    for r in range(PH):
        for d in range(3):
            pr[r, 2 * r + d] = 1.0 / 3.0
    return pr


_SEL = _build_sel()            # (218, 270)  ~235 KB
_POOL_COLS = _build_pool_cols()  # (180, 88)
_POOL_ROWS = _build_pool_rows()  # (31, 64)


# ----------------------------- in-kernel math --------------------------------

def _erf(x):
    # Abramowitz & Stegun 7.1.26 polynomial erf (max abs err ~1.5e-7 ~ f32 eps).
    # Only mul/add/exp/recip/where so it lowers cleanly in Mosaic.
    # TODO(synk): jax.lax.erf has no guaranteed Mosaic lowering; polynomial kept.
    a1, a2, a3, a4, a5 = (0.254829592, -0.284496736, 1.421413741,
                          -1.453152027, 1.061405429)
    p = 0.3275911
    ax = jnp.abs(x)
    # EUP approximate reciprocal instead of a VALU divide (review item #7).
    t = pl.reciprocal(1.0 + p * ax, approx=True)
    poly = t * (a1 + t * (a2 + t * (a3 + t * (a4 + t * a5))))
    y = 1.0 - poly * jnp.exp(-ax * ax)
    return jnp.where(x < 0, -y, y)


def _torch_gelu(x):
    # Exactly the module's op order: v3=x*0.5; v4=x*c; v5=erf(v4); v6=v5+1; v7=v3*v6
    return (x * 0.5) * (_erf(x * 0.7071067811865476) + 1.0)


# ------------------------------ fused kernel ---------------------------------

def fused_forward_kernel(x_ref, w1_ref, b1_ref, w2_ref, b2_ref,
                         sel_ref, poolc_ref, poolr_ref, o_ref):
    # x_ref    : (N*CIN, H*W) = (6, 242)   row b*CIN+c = flattened image
    # w1_ref   : (C1, K*CIN)  = (18, 9)    W1f[o, k*CIN+c] = w1[o, c, k]
    # b1_ref   : (C1, 1)
    # w2_ref   : (C2, K*C1)   = (64, 54)   W2f[o, k*C1 +c] = w2[o, c, k]
    # b2_ref   : (C2, 1)
    # sel_ref  : (LPOOL, K*L2) = (218, 270) fused flatten+stride-2 gather (0/1)
    # poolc_ref: (N*L2, N*PW) = (180, 88)  block-diagonal 1/3 pooling operator
    # poolr_ref: (PH, C2)     = (31, 64)   1/3 pooling operator over channels
    # o_ref    : (N, PH, PW)  = (2, 31, 44)
    f32 = jnp.float32

    # ---- Stage 1: ReLU + MaxPool2d(3, stride=1), fully vectorized -----------
    # Flattened-image layout: column l = W*h + w.  3x3 window max = vertical
    # 3-max over lane shifts of +W, +2W, then horizontal 3-max over +1, +2.
    # Positions with w >= WP hold junk-but-finite values; they are never
    # selected by SEL below, so they contribute exactly 0.
    xr = jnp.maximum(x_ref[...], 0.0)                                 # (6, 242)
    vmax = jnp.maximum(jnp.maximum(xr[:, 0:LPOOL + 2],
                                   xr[:, W:W + LPOOL + 2]),
                       xr[:, 2 * W:2 * W + LPOOL + 2])                # (6, 220)
    pooled = jnp.maximum(jnp.maximum(vmax[:, 0:LPOOL],
                                     vmax[:, 1:LPOOL + 1]),
                         vmax[:, 2:LPOOL + 2])                        # (6, 218)

    # ---- Stage 2: Conv1d(3->18, k=3, stride=2, pad=1) + erf-GELU ------------
    # One gather matmul with the precomputed selection (flatten + per-tap
    # stride-2 gather + zero pad all folded in), then one fused-tap MXU
    # contraction (18,9)@(9,180).
    xg = jnp.dot(pooled, sel_ref[...], preferred_element_type=f32)    # (6, 270)
    rows = []
    for k in range(K):                                                # static
        rows.append(jnp.concatenate(
            [xg[b * CIN:(b + 1) * CIN, k * L2:(k + 1) * L2] for b in range(N)],
            axis=1))                                                  # (3, 180)
    x2 = jnp.concatenate(rows, axis=0)                                # (9, 180)
    h1 = _torch_gelu(jnp.dot(w1_ref[...], x2, preferred_element_type=f32)
                     + b1_ref[...])                                   # (18, 180)

    # ---- Stage 3: Conv1d(18->64, k=3, stride=1, pad=1) + erf-GELU -----------
    # The +-1 taps are plain lane shifts (slice + concat) with the pad column
    # and the batch-seam column zeroed -- no selection matmul (review item #1).
    lane = lax.broadcasted_iota(jnp.int32, (C1, NL2), 1)
    z = jnp.zeros((C1, 1), f32)
    h_left = jnp.where(lane == L2, 0.0,
                       jnp.concatenate([z, h1[:, :NL2 - 1]], axis=1))  # (18,180)
    h_right = jnp.where(lane == L2 - 1, 0.0,
                        jnp.concatenate([h1[:, 1:], z], axis=1))       # (18,180)
    hstack = jnp.concatenate([h_left, h1, h_right], axis=0)            # (54,180)
    y = _torch_gelu(jnp.dot(w2_ref[...], hstack, preferred_element_type=f32)
                    + b2_ref[...])                                     # (64,180)

    # ---- Stage 4: AvgPool2d(3, stride=2) on each batch's (64, 90) map -------
    # Separable pooling as two banded-1/3 matmuls, batched across N via the
    # block-diagonal column operator (1/9 scale folded in, no divides).
    t = jnp.dot(y, poolc_ref[...], preferred_element_type=f32)         # (64, 88)
    out = jnp.dot(poolr_ref[...], t, preferred_element_type=f32)       # (31, 88)
    o_ref[0] = out[:, 0:PW].astype(o_ref.dtype)
    o_ref[1] = out[:, PW:NPW].astype(o_ref.dtype)


# -------------------------------- wrapper ------------------------------------

@jax.jit
def model_forward(x1, params):
    w1, b1, w2, b2 = params
    # Only parameter-sized / metadata-only glue remains:
    x_flat = x1.reshape(N * CIN, H * W)                        # pure reshape, (6, 242)
    w1f = jnp.transpose(w1, (0, 2, 1)).reshape(C1, K * CIN)    # (18, 9)
    w2f = jnp.transpose(w2, (0, 2, 1)).reshape(C2, K * C1)     # (64, 54)
    b1r = b1.reshape(C1, 1)
    b2r = b2.reshape(C2, 1)
    return pl.pallas_call(
        fused_forward_kernel,
        out_shape=jax.ShapeDtypeStruct((N, PH, PW), x1.dtype),
    )(x_flat, w1f, b1r, w2f, b2r, _SEL, _POOL_COLS, _POOL_ROWS)


if __name__ == "__main__":
    key = jax.random.PRNGKey(0)
    kx, kw1, kb1, kw2, kb2 = jax.random.split(key, 5)

    # Module's own input shape.
    x1 = jax.random.normal(kx, (N, CIN, 1, H, W), jnp.float32)

    # Deterministic PyTorch-default-style uniform init (bound = 1/sqrt(Cin*k)).
    bound1 = 1.0 / math.sqrt(CIN * K)
    w1 = jax.random.uniform(kw1, (C1, CIN, K), jnp.float32, -bound1, bound1)
    b1 = jax.random.uniform(kb1, (C1,), jnp.float32, -bound1, bound1)
    bound2 = 1.0 / math.sqrt(C1 * K)
    w2 = jax.random.uniform(kw2, (C2, C1, K), jnp.float32, -bound2, bound2)
    b2 = jax.random.uniform(kb2, (C2,), jnp.float32, -bound2, bound2)

    out = model_forward(x1, (w1, b1, w2, b2))
    out = jax.block_until_ready(out)
    assert out.shape == (N, PH, PW), out.shape
    assert bool(jnp.all(jnp.isfinite(out)))
    print("KERNEL_OK")
</pallas_src>

<mosaic_0001>
module attributes {stable_mosaic.version = 11 : i64} {
  func.func @fused_forward_kernel(%arg0: memref<6x242xf32, #tpu.memory_space<vmem>>, %arg1: memref<18x9xf32, #tpu.memory_space<vmem>>, %arg2: memref<18x1xf32, #tpu.memory_space<vmem>>, %arg3: memref<64x54xf32, #tpu.memory_space<vmem>>, %arg4: memref<64x1xf32, #tpu.memory_space<vmem>>, %arg5: memref<218x270xf32, #tpu.memory_space<vmem>>, %arg6: memref<180x88xf32, #tpu.memory_space<vmem>>, %arg7: memref<31x64xf32, #tpu.memory_space<vmem>>, %arg8: memref<2x31x44xf32, #tpu.memory_space<vmem>>) attributes {dimension_semantics = [], scalar_prefetch = 0 : i64, scratch_operands = 0 : i64, tpu.core_type = #tpu.core_type<tc>} {
    %c0 = arith.constant 0 : index
    %c0_0 = arith.constant 0 : index
    %0 = vector.load %arg0[%c0, %c0_0] : memref<6x242xf32, #tpu.memory_space<vmem>>, vector<6x242xf32>
    %cst = arith.constant 0.000000e+00 : f32
    %1 = vector.broadcast %cst : f32 to vector<6x242xf32>
    %2 = arith.maximumf %0, %1 : vector<6x242xf32>
    %3 = vector.extract_strided_slice %2 {offsets = [0, 0], sizes = [6, 220], strides = [1, 1]} : vector<6x242xf32> to vector<6x220xf32>
    %4 = vector.extract_strided_slice %2 {offsets = [0, 11], sizes = [6, 220], strides = [1, 1]} : vector<6x242xf32> to vector<6x220xf32>
    %5 = arith.maximumf %3, %4 : vector<6x220xf32>
    %6 = vector.extract_strided_slice %2 {offsets = [0, 22], sizes = [6, 220], strides = [1, 1]} : vector<6x242xf32> to vector<6x220xf32>
    %7 = arith.maximumf %5, %6 : vector<6x220xf32>
    %8 = vector.extract_strided_slice %7 {offsets = [0, 0], sizes = [6, 218], strides = [1, 1]} : vector<6x220xf32> to vector<6x218xf32>
    %9 = vector.extract_strided_slice %7 {offsets = [0, 1], sizes = [6, 218], strides = [1, 1]} : vector<6x220xf32> to vector<6x218xf32>
    %10 = arith.maximumf %8, %9 : vector<6x218xf32>
    %11 = vector.extract_strided_slice %7 {offsets = [0, 2], sizes = [6, 218], strides = [1, 1]} : vector<6x220xf32> to vector<6x218xf32>
    %12 = arith.maximumf %10, %11 : vector<6x218xf32>
    %c0_1 = arith.constant 0 : index
    %c0_2 = arith.constant 0 : index
    %13 = vector.load %arg5[%c0_1, %c0_2] : memref<218x270xf32, #tpu.memory_space<vmem>>, vector<218x270xf32>
    %cst_3 = arith.constant dense<0.000000e+00> : vector<6x270xf32>
    %14 = tpu.matmul %12, %13, %cst_3 {dimension_numbers = #tpu.dot_dimension_numbers<[1], [0], [0], [1], [0, 0, 1, 1], [], []>} : vector<6x218xf32>, vector<218x270xf32>, vector<6x270xf32> -> vector<6x270xf32>
    %15 = vector.extract_strided_slice %14 {offsets = [0, 0], sizes = [3, 90], strides = [1, 1]} : vector<6x270xf32> to vector<3x90xf32>
    %16 = vector.extract_strided_slice %14 {offsets = [3, 0], sizes = [3, 90], strides = [1, 1]} : vector<6x270xf32> to vector<3x90xf32>
    %17 = tpu.concatenate %15, %16 in 1 : vector<3x90xf32>, vector<3x90xf32> -> vector<3x180xf32>
    %18 = vector.extract_strided_slice %14 {offsets = [0, 90], sizes = [3, 90], strides = [1, 1]} : vector<6x270xf32> to vector<3x90xf32>
    %19 = vector.extract_strided_slice %14 {offsets = [3, 90], sizes = [3, 90], strides = [1, 1]} : vector<6x270xf32> to vector<3x90xf32>
    %20 = tpu.concatenate %18, %19 in 1 : vector<3x90xf32>, vector<3x90xf32> -> vector<3x180xf32>
    %21 = vector.extract_strided_slice %14 {offsets = [0, 180], sizes = [3, 90], strides = [1, 1]} : vector<6x270xf32> to vector<3x90xf32>
    %22 = vector.extract_strided_slice %14 {offsets = [3, 180], sizes = [3, 90], strides = [1, 1]} : vector<6x270xf32> to vector<3x90xf32>
    %23 = tpu.concatenate %21, %22 in 1 : vector<3x90xf32>, vector<3x90xf32> -> vector<3x180xf32>
    %24 = tpu.concatenate %17, %20, %23 in 0 : vector<3x180xf32>, vector<3x180xf32>, vector<3x180xf32> -> vector<9x180xf32>
    %c0_4 = arith.constant 0 : index
    %c0_5 = arith.constant 0 : index
    %25 = vector.load %arg1[%c0_4, %c0_5] : memref<18x9xf32, #tpu.memory_space<vmem>>, vector<18x9xf32>
    %cst_6 = arith.constant dense<0.000000e+00> : vector<18x180xf32>
    %26 = tpu.matmul %25, %24, %cst_6 {dimension_numbers = #tpu.dot_dimension_numbers<[1], [0], [0], [1], [0, 0, 1, 1], [], []>} : vector<18x9xf32>, vector<9x180xf32>, vector<18x180xf32> -> vector<18x180xf32>
    %c0_7 = arith.constant 0 : index
    %c0_8 = arith.constant 0 : index
    %27 = vector.load %arg2[%c0_7, %c0_8] : memref<18x1xf32, #tpu.memory_space<vmem>>, vector<18x1xf32>
    %28 = vector.broadcast %27 : vector<18x1xf32> to vector<18x180xf32>
    %29 = arith.addf %26, %28 : vector<18x180xf32>
    %cst_9 = arith.constant 5.000000e-01 : f32
    %30 = vector.broadcast %cst_9 : f32 to vector<18x180xf32>
    %31 = arith.mulf %29, %30 : vector<18x180xf32>
    %cst_10 = arith.constant 0.707106769 : f32
    %32 = vector.broadcast %cst_10 : f32 to vector<18x180xf32>
    %33 = arith.mulf %29, %32 : vector<18x180xf32>
    %34 = math.absf %33 : vector<18x180xf32>
    %cst_11 = arith.constant 0.327591091 : f32
    %35 = vector.broadcast %cst_11 : f32 to vector<18x180xf32>
    %36 = arith.mulf %35, %34 : vector<18x180xf32>
    %cst_12 = arith.constant 1.000000e+00 : f32
    %37 = vector.broadcast %cst_12 : f32 to vector<18x180xf32>
    %38 = arith.addf %37, %36 : vector<18x180xf32>
    %39 = tpu.reciprocal %38 {approx = true} : vector<18x180xf32> -> vector<18x180xf32>
    %cst_13 = arith.constant 1.06140542 : f32
    %40 = vector.broadcast %cst_13 : f32 to vector<18x180xf32>
    %41 = arith.mulf %39, %40 : vector<18x180xf32>
    %cst_14 = arith.constant -1.45315206 : f32
    %42 = vector.broadcast %cst_14 : f32 to vector<18x180xf32>
    %43 = arith.addf %42, %41 : vector<18x180xf32>
    %44 = arith.mulf %39, %43 : vector<18x180xf32>
    %cst_15 = arith.constant 1.42141378 : f32
    %45 = vector.broadcast %cst_15 : f32 to vector<18x180xf32>
    %46 = arith.addf %45, %44 : vector<18x180xf32>
    %47 = arith.mulf %39, %46 : vector<18x180xf32>
    %cst_16 = arith.constant -0.284496725 : f32
    %48 = vector.broadcast %cst_16 : f32 to vector<18x180xf32>
    %49 = arith.addf %48, %47 : vector<18x180xf32>
    %50 = arith.mulf %39, %49 : vector<18x180xf32>
    %cst_17 = arith.constant 0.254829586 : f32
    %51 = vector.broadcast %cst_17 : f32 to vector<18x180xf32>
    %52 = arith.addf %51, %50 : vector<18x180xf32>
    %53 = arith.mulf %39, %52 : vector<18x180xf32>
    %cst_18 = arith.constant 0.000000e+00 : f32
    %54 = vector.broadcast %cst_18 : f32 to vector<18x180xf32>
    %55 = arith.subf %54, %34 : vector<18x180xf32>
    %56 = arith.mulf %55, %34 : vector<18x180xf32>
    %57 = math.exp %56 : vector<18x180xf32>
    %58 = arith.mulf %53, %57 : vector<18x180xf32>
    %cst_19 = arith.constant 1.000000e+00 : f32
    %59 = vector.broadcast %cst_19 : f32 to vector<18x180xf32>
    %60 = arith.subf %59, %58 : vector<18x180xf32>
    %cst_20 = arith.constant 0.000000e+00 : f32
    %61 = vector.broadcast %cst_20 : f32 to vector<18x180xf32>
    %62 = arith.cmpf olt, %33, %61 : vector<18x180xf32>
    %cst_21 = arith.constant 0.000000e+00 : f32
    %63 = vector.broadcast %cst_21 : f32 to vector<18x180xf32>
    %64 = arith.subf %63, %60 : vector<18x180xf32>
    %65 = arith.select %62, %64, %60 : vector<18x180xi1>, vector<18x180xf32>
    %cst_22 = arith.constant 1.000000e+00 : f32
    %66 = vector.broadcast %cst_22 : f32 to vector<18x180xf32>
    %67 = arith.addf %65, %66 : vector<18x180xf32>
    %68 = arith.mulf %31, %67 : vector<18x180xf32>
    %69 = tpu.iota {dimensions = array<i32: 1>} : vector<18x180xi32>
    %cst_23 = arith.constant 0.000000e+00 : f32
    %70 = vector.broadcast %cst_23 : f32 to vector<18x1xf32>
    %c90_i32 = arith.constant 90 : i32
    %71 = vector.broadcast %c90_i32 : i32 to vector<18x180xi32>
    %72 = arith.cmpi eq, %69, %71 : vector<18x180xi32>
    %73 = vector.extract_strided_slice %68 {offsets = [0, 0], sizes = [18, 179], strides = [1, 1]} : vector<18x180xf32> to vector<18x179xf32>
    %74 = tpu.concatenate %70, %73 in 1 : vector<18x1xf32>, vector<18x179xf32> -> vector<18x180xf32>
    %cst_24 = arith.constant 0.000000e+00 : f32
    %75 = vector.broadcast %cst_24 : f32 to vector<18x180xf32>
    %76 = arith.select %72, %75, %74 : vector<18x180xi1>, vector<18x180xf32>
    %c89_i32 = arith.constant 89 : i32
    %77 = vector.broadcast %c89_i32 : i32 to vector<18x180xi32>
    %78 = arith.cmpi eq, %69, %77 : vector<18x180xi32>
    %79 = vector.extract_strided_slice %68 {offsets = [0, 1], sizes = [18, 179], strides = [1, 1]} : vector<18x180xf32> to vector<18x179xf32>
    %80 = tpu.concatenate %79, %70 in 1 : vector<18x179xf32>, vector<18x1xf32> -> vector<18x180xf32>
    %cst_25 = arith.constant 0.000000e+00 : f32
    %81 = vector.broadcast %cst_25 : f32 to vector<18x180xf32>
    %82 = arith.select %78, %81, %80 : vector<18x180xi1>, vector<18x180xf32>
    %83 = tpu.concatenate %76, %68, %82 in 0 : vector<18x180xf32>, vector<18x180xf32>, vector<18x180xf32> -> vector<54x180xf32>
    %c0_26 = arith.constant 0 : index
    %c0_27 = arith.constant 0 : index
    %84 = vector.load %arg3[%c0_26, %c0_27] : memref<64x54xf32, #tpu.memory_space<vmem>>, vector<64x54xf32>
    %cst_28 = arith.constant dense<0.000000e+00> : vector<64x180xf32>
    %85 = tpu.matmul %84, %83, %cst_28 {dimension_numbers = #tpu.dot_dimension_numbers<[1], [0], [0], [1], [0, 0, 1, 1], [], []>} : vector<64x54xf32>, vector<54x180xf32>, vector<64x180xf32> -> vector<64x180xf32>
    %c0_29 = arith.constant 0 : index
    %c0_30 = arith.constant 0 : index
    %86 = vector.load %arg4[%c0_29, %c0_30] : memref<64x1xf32, #tpu.memory_space<vmem>>, vector<64x1xf32>
    %87 = vector.broadcast %86 : vector<64x1xf32> to vector<64x180xf32>
    %88 = arith.addf %85, %87 : vector<64x180xf32>
    %cst_31 = arith.constant 5.000000e-01 : f32
    %89 = vector.broadcast %cst_31 : f32 to vector<64x180xf32>
    %90 = arith.mulf %88, %89 : vector<64x180xf32>
    %cst_32 = arith.constant 0.707106769 : f32
    %91 = vector.broadcast %cst_32 : f32 to vector<64x180xf32>
    %92 = arith.mulf %88, %91 : vector<64x180xf32>
    %93 = math.absf %92 : vector<64x180xf32>
    %cst_33 = arith.constant 0.327591091 : f32
    %94 = vector.broadcast %cst_33 : f32 to vector<64x180xf32>
    %95 = arith.mulf %94, %93 : vector<64x180xf32>
    %cst_34 = arith.constant 1.000000e+00 : f32
    %96 = vector.broadcast %cst_34 : f32 to vector<64x180xf32>
    %97 = arith.addf %96, %95 : vector<64x180xf32>
    %98 = tpu.reciprocal %97 {approx = true} : vector<64x180xf32> -> vector<64x180xf32>
    %cst_35 = arith.constant 1.06140542 : f32
    %99 = vector.broadcast %cst_35 : f32 to vector<64x180xf32>
    %100 = arith.mulf %98, %99 : vector<64x180xf32>
    %cst_36 = arith.constant -1.45315206 : f32
    %101 = vector.broadcast %cst_36 : f32 to vector<64x180xf32>
    %102 = arith.addf %101, %100 : vector<64x180xf32>
    %103 = arith.mulf %98, %102 : vector<64x180xf32>
    %cst_37 = arith.constant 1.42141378 : f32
    %104 = vector.broadcast %cst_37 : f32 to vector<64x180xf32>
    %105 = arith.addf %104, %103 : vector<64x180xf32>
    %106 = arith.mulf %98, %105 : vector<64x180xf32>
    %cst_38 = arith.constant -0.284496725 : f32
    %107 = vector.broadcast %cst_38 : f32 to vector<64x180xf32>
    %108 = arith.addf %107, %106 : vector<64x180xf32>
    %109 = arith.mulf %98, %108 : vector<64x180xf32>
    %cst_39 = arith.constant 0.254829586 : f32
    %110 = vector.broadcast %cst_39 : f32 to vector<64x180xf32>
    %111 = arith.addf %110, %109 : vector<64x180xf32>
    %112 = arith.mulf %98, %111 : vector<64x180xf32>
    %cst_40 = arith.constant 0.000000e+00 : f32
    %113 = vector.broadcast %cst_40 : f32 to vector<64x180xf32>
    %114 = arith.subf %113, %93 : vector<64x180xf32>
    %115 = arith.mulf %114, %93 : vector<64x180xf32>
    %116 = math.exp %115 : vector<64x180xf32>
    %117 = arith.mulf %112, %116 : vector<64x180xf32>
    %cst_41 = arith.constant 1.000000e+00 : f32
    %118 = vector.broadcast %cst_41 : f32 to vector<64x180xf32>
    %119 = arith.subf %118, %117 : vector<64x180xf32>
    %cst_42 = arith.constant 0.000000e+00 : f32
    %120 = vector.broadcast %cst_42 : f32 to vector<64x180xf32>
    %121 = arith.cmpf olt, %92, %120 : vector<64x180xf32>
    %cst_43 = arith.constant 0.000000e+00 : f32
    %122 = vector.broadcast %cst_43 : f32 to vector<64x180xf32>
    %123 = arith.subf %122, %119 : vector<64x180xf32>
    %124 = arith.select %121, %123, %119 : vector<64x180xi1>, vector<64x180xf32>
    %cst_44 = arith.constant 1.000000e+00 : f32
    %125 = vector.broadcast %cst_44 : f32 to vector<64x180xf32>
    %126 = arith.addf %124, %125 : vector<64x180xf32>
    %127 = arith.mulf %90, %126 : vector<64x180xf32>
    %c0_45 = arith.constant 0 : index
    %c0_46 = arith.constant 0 : index
    %128 = vector.load %arg6[%c0_45, %c0_46] : memref<180x88xf32, #tpu.memory_space<vmem>>, vector<180x88xf32>
    %cst_47 = arith.constant dense<0.000000e+00> : vector<64x88xf32>
    %129 = tpu.matmul %127, %128, %cst_47 {dimension_numbers = #tpu.dot_dimension_numbers<[1], [0], [0], [1], [0, 0, 1, 1], [], []>} : vector<64x180xf32>, vector<180x88xf32>, vector<64x88xf32> -> vector<64x88xf32>
    %c0_48 = arith.constant 0 : index
    %c0_49 = arith.constant 0 : index
    %130 = vector.load %arg7[%c0_48, %c0_49] : memref<31x64xf32, #tpu.memory_space<vmem>>, vector<31x64xf32>
    %cst_50 = arith.constant dense<0.000000e+00> : vector<31x88xf32>
    %131 = tpu.matmul %130, %129, %cst_50 {dimension_numbers = #tpu.dot_dimension_numbers<[1], [0], [0], [1], [0, 0, 1, 1], [], []>} : vector<31x64xf32>, vector<64x88xf32>, vector<31x88xf32> -> vector<31x88xf32>
    %132 = vector.extract_strided_slice %131 {offsets = [0, 0], sizes = [31, 44], strides = [1, 1]} : vector<31x88xf32> to vector<31x44xf32>
    %c0_51 = arith.constant 0 : index
    %c0_52 = arith.constant 0 : index
    %c0_53 = arith.constant 0 : index
    %133 = vector.load %arg8[%c0_51, %c0_52, %c0_53] : memref<2x31x44xf32, #tpu.memory_space<vmem>>, vector<1x31x44xf32>
    %134 = vector.shape_cast %133 : vector<1x31x44xf32> to vector<31x44xf32>
    %135 = vector.shape_cast %132 : vector<31x44xf32> to vector<1x31x44xf32>
    tpu.vector_store %arg8[%c0_51, %c0_52, %c0_53], %135 {strides = array<i32>} : memref<2x31x44xf32, #tpu.memory_space<vmem>>, vector<1x31x44xf32>,
    %136 = vector.extract_strided_slice %131 {offsets = [0, 44], sizes = [31, 44], strides = [1, 1]} : vector<31x88xf32> to vector<31x44xf32>
    %c1 = arith.constant 1 : index
    %c0_54 = arith.constant 0 : index
    %c0_55 = arith.constant 0 : index
    %137 = vector.load %arg8[%c1, %c0_54, %c0_55] : memref<2x31x44xf32, #tpu.memory_space<vmem>>, vector<1x31x44xf32>
    %138 = vector.shape_cast %137 : vector<1x31x44xf32> to vector<31x44xf32>
    %139 = vector.shape_cast %136 : vector<31x44xf32> to vector<1x31x44xf32>
    tpu.vector_store %arg8[%c1, %c0_54, %c0_55], %139 {strides = array<i32>} : memref<2x31x44xf32, #tpu.memory_space<vmem>>, vector<1x31x44xf32>,
    return
  }
}

</mosaic_0001>

<llo_original>
// kernel: model_forward.1
$region0: #{model_forward.1}
  #allocation0 [shape = 'u32[]', space=smem, size = 0x4, offset = 0x4, fixed_abs, tag = 'smem constant byte address 0x4 - core index']
  #allocation1 [shape = 'u32[72,128]{1,0:T(1,128)}', space=vmem, size = 0x9000, scoped, tag = 'internal scratch']
  %s0 = inlined_call_operand.vmem [shape: f32[6,242], index: 0, kind: input, shape index: {}]
  %s1 = inlined_call_operand.vmem [shape: f32[18,9], index: 1, kind: input, shape index: {}]
  %s2 = inlined_call_operand.vmem [shape: f32[18,1], index: 2, kind: input, shape index: {}]
  %s3 = inlined_call_operand.vmem [shape: f32[64,54], index: 3, kind: input, shape index: {}]
  %s4 = inlined_call_operand.vmem [shape: f32[64,1], index: 4, kind: input, shape index: {}]
  %s5 = inlined_call_operand.hbm [shape: f32[218,270], index: 5, kind: input, shape index: {}]
  %s6 = inlined_call_operand.vmem [shape: f32[180,88], index: 6, kind: input, shape index: {}]
  %s7 = inlined_call_operand.vmem [shape: f32[31,64], index: 7, kind: input, shape index: {}]
  %s8 = inlined_call_operand.vmem [shape: f32[2,31,44], index: 8, kind: output, shape index: {}]
  %s9 = sld [smem:[#allocation0]]
  $region46: #{model_forward.1} parent=0
    _
  %s11 = ssub.s32 1, %s9
  %s12 = scalar_select 0, %s11, %s9
  $region1: #{model_forward.1} parent=0
    #allocation2 [shape = 'u8[344064]{0}', space=vmem, size = 0x54000, scoped, tag = 'input window, operand 5, single buffered']
    #allocation3 [shape = 's32[1]{0}', space=sflag, size = 0x4, scoped, tag = 'scoped memory for model_forward.1']
    %13 = vsyncpa [#allocation3], 0
    // Predicated region
    $region2: #{model_forward.1} parent=1 // pred_check
      _
    $region3: #{model_forward.1} parent=1 // pred_check_branch
      %15 = sbr.rel (0) target = $region5
    $region4: #{model_forward.1} parent=1 // pred_region
      _
    $region5: #{model_forward.1} parent=1 // pred_fallthru
      _
    // Predicated region
    $region6: #{model_forward.1} parent=1 // pred_check
      _
    $region7: #{model_forward.1} parent=1 // pred_check_branch
      %17 = sbr.rel (0) target = $region9
    $region8: #{model_forward.1} parent=1 // pred_region
      _
    $region9: #{model_forward.1} parent=1 // pred_fallthru
      _
    // Predicated region
    $region10: #{model_forward.1} parent=1 // pred_check
      _
    $region11: #{model_forward.1} parent=1 // pred_check_branch
      %19 = sbr.rel (0) target = $region13
    $region12: #{model_forward.1} parent=1 // pred_region
      _
    $region13: #{model_forward.1} parent=1 // pred_fallthru
      _
    // Predicated region
    $region14: #{model_forward.1} parent=1 // pred_check
      _
    $region15: #{model_forward.1} parent=1 // pred_check_branch
      %21 = sbr.rel (0) target = $region17
    $region16: #{model_forward.1} parent=1 // pred_region
      _
    $region17: #{model_forward.1} parent=1 // pred_fallthru
      _
    // Predicated region
    $region18: #{model_forward.1} parent=1 // pred_check
      _
    $region19: #{model_forward.1} parent=1 // pred_check_branch
      %23 = sbr.rel (0) target = $region21
    $region20: #{model_forward.1} parent=1 // pred_region
      _
    $region21: #{model_forward.1} parent=1 // pred_fallthru
      _
    // Predicated region
    $region22: #{model_forward.1} parent=1 // pred_check
      _
    $region23: #{model_forward.1} parent=1 // pred_check_branch
      %25 = sbr.rel (0) target = $region25
    $region24: #{model_forward.1} parent=1 // pred_region
      %27 = vsyncadd [#allocation3], 0
      %s28 = sshll.u32 %s5, 4
      %s29 = int_to_ptr.hbm [resolvable:$true] %s28
      %s30 = sshll.u32 [#allocation2], 4
      %s31 = int_to_ptr.vmem [resolvable:$true] %s30
      %36 = dma.hbm_to_vmem [thread:$0]  %s29, 10752, %s31, [#allocation3], 384, 384, 24
    $region25: #{model_forward.1} parent=1 // pred_fallthru
      _
    // Predicated region
    $region26: #{model_forward.1} parent=1 // pred_check
      _
    $region27: #{model_forward.1} parent=1 // pred_check_branch
      %38 = sbr.rel (0) target = $region29
    $region28: #{model_forward.1} parent=1 // pred_region
      _
    $region29: #{model_forward.1} parent=1 // pred_fallthru
      _
    // Predicated region
    $region30: #{model_forward.1} parent=1 // pred_check
      _
    $region31: #{model_forward.1} parent=1 // pred_check_branch
      %40 = sbr.rel (0) target = $region33
    $region32: #{model_forward.1} parent=1 // pred_region
      _
    $region33: #{model_forward.1} parent=1 // pred_fallthru
      _
    // Predicated region
    $region34: #{model_forward.1} parent=1 // pred_check
      _
    $region35: #{model_forward.1} parent=1 // pred_check_branch
      %42 = sbr.rel (0) target = $region37
    $region36: #{model_forward.1} parent=1 // pred_region
      %44 = dma.done [#allocation3], 10752
    $region37: #{model_forward.1} parent=1 // pred_fallthru
      _
    %v45 = vld [vmem:[%s0] sm:$0x3f]
    %v46 = vld [vmem:[%s0 + $0x8] sm:$0x3f]
    %v47 = vmax.f32 %v45, 0.0
    %v48 = vmax.f32 %v46, 0.0
    %51 = vrot.lane.b32.xlu0 %v47, 117
    %v52 = vpop.permute.xlu0 %51
    %53 = vrot.lane.b32.xlu0 %v48, 117
    %v54 = vpop.permute.xlu0 %53
    %vm55 = vcmask 957440
    %v56 = vsel %vm55, %v52, %v54
    %v59 = vmax.f32 %v47, %v56
    %v60 = vmax.f32 %v48, %v54
    %61 = vrot.lane.b32.xlu0 %v47, 106
    %v62 = vpop.permute.xlu0 %61
    %63 = vrot.lane.b32.xlu0 %v48, 106
    %v64 = vpop.permute.xlu0 %63
    %vm65 = vcmask 867328
    %v66 = vsel %vm65, %v62, %v64
    %v69 = vmax.f32 %v59, %v66
    %v70 = vmax.f32 %v60, %v64
    %73 = vrot.lane.b32.xlu0 %v69, 127
    %v74 = vpop.permute.xlu0 %73
    %75 = vrot.lane.b32.xlu0 %v70, 127
    %v76 = vpop.permute.xlu0 %75
    %vm77 = vcmask 1039360
    %v78 = vsel %vm77, %v74, %v76
    %v81 = vmax.f32 %v69, %v78
    %v82 = vmax.f32 %v70, %v76
    %83 = vrot.lane.b32.xlu0 %v69, 126
    %v84 = vpop.permute.xlu0 %83
    %85 = vrot.lane.b32.xlu0 %v70, 126
    %v86 = vpop.permute.xlu0 %85
    %vm87 = vcmask 1031168
    %v88 = vsel %vm87, %v84, %v86
    %v91 = vmax.f32 %v81, %v88
    %v92 = vmax.f32 %v82, %v86
    %v93 = vld [vmem:[#allocation2] sm:$0xff]
    %v94 = vld [vmem:[#allocation2 + $0x8] sm:$0xff]
    %v95 = vld [vmem:[#allocation2 + $0x10] sm:$0xff]
    %v96 = vld [vmem:[#allocation2 + $0x18] sm:$0xff]
    %v97 = vld [vmem:[#allocation2 + $0x20] sm:$0xff]
    %v98 = vld [vmem:[#allocation2 + $0x28] sm:$0xff]
    %v99 = vld [vmem:[#allocation2 + $0x30] sm:$0xff]
    %v100 = vld [vmem:[#allocation2 + $0x38] sm:$0xff]
    %v101 = vld [vmem:[#allocation2 + $0x40] sm:$0xff]
    %v102 = vld [vmem:[#allocation2 + $0x48] sm:$0xff]
    %v103 = vld [vmem:[#allocation2 + $0x50] sm:$0xff]
    %v104 = vld [vmem:[#allocation2 + $0x58] sm:$0xff]
    %v105 = vld [vmem:[#allocation2 + $0x60] sm:$0xff]
    %v106 = vld [vmem:[#allocation2 + $0x68] sm:$0xff]
    %v107 = vld [vmem:[#allocation2 + $0x70] sm:$0xff]
    %v108 = vld [vmem:[#allocation2 + $0x78] sm:$0xff]
    %v109 = vld [vmem:[#allocation2 + $0x80] sm:$0xff]
    %v110 = vld [vmem:[#allocation2 + $0x88] sm:$0xff]
    %v111 = vld [vmem:[#allocation2 + $0x90] sm:$0xff]
    %v112 = vld [vmem:[#allocation2 + $0x98] sm:$0xff]
    %v113 = vld [vmem:[#allocation2 + $0xa0] sm:$0xff]
    %v114 = vld [vmem:[#allocation2 + $0xa8] sm:$0xff]
    %v115 = vld [vmem:[#allocation2 + $0xb0] sm:$0xff]
    %v116 = vld [vmem:[#allocation2 + $0xb8] sm:$0xff]
    %v117 = vld [vmem:[#allocation2 + $0xc0] sm:$0xff]
    %v118 = vld [vmem:[#allocation2 + $0xc8] sm:$0xff]
    %v119 = vld [vmem:[#allocation2 + $0xd0] sm:$0xff]
    %v120 = vld [vmem:[#allocation2 + $0xd8] sm:$0xff]
    %v121 = vld [vmem:[#allocation2 + $0xe0] sm:$0xff]
    %v122 = vld [vmem:[#allocation2 + $0xe8] sm:$0xff]
    %v123 = vld [vmem:[#allocation2 + $0xf0] sm:$0xff]
    %v124 = vld [vmem:[#allocation2 + $0xf8] sm:$0xff]
    %v125 = vld [vmem:[#allocation2 + $0x100] sm:$0xff]
    %v126 = vld [vmem:[#allocation2 + $0x108] sm:$0xff]
    %v127 = vld [vmem:[#allocation2 + $0x110] sm:$0xff]
    %v128 = vld [vmem:[#allocation2 + $0x118] sm:$0xff]
    %v129 = vld [vmem:[#allocation2 + $0x120] sm:$0xff]
    %v130 = vld [vmem:[#allocation2 + $0x128] sm:$0xff]
    %v131 = vld [vmem:[#allocation2 + $0x130] sm:$0xff]
    %v132 = vld [vmem:[#allocation2 + $0x138] sm:$0xff]
    %v133 = vld [vmem:[#allocation2 + $0x140] sm:$0xff]
    %v134 = vld [vmem:[#allocation2 + $0x148] sm:$0xff]
    %v135 = vld [vmem:[#allocation2 + $0x150] sm:$0xff]
    %v136 = vld [vmem:[#allocation2 + $0x158] sm:$0xff]
    %v137 = vld [vmem:[#allocation2 + $0x160] sm:$0xff]
    %v138 = vld [vmem:[#allocation2 + $0x168] sm:$0xff]
    %v139 = vld [vmem:[#allocation2 + $0x170] sm:$0xff]
    %v140 = vld [vmem:[#allocation2 + $0x178] sm:$0xff]
    %v141 = vld [vmem:[#allocation2 + $0x180] sm:$0xff]
    %v142 = vld [vmem:[#allocation2 + $0x188] sm:$0xff]
    %v143 = vld [vmem:[#allocation2 + $0x190] sm:$0xff]
    %v144 = vld [vmem:[#allocation2 + $0x198] sm:$0xff]
    %v145 = vld [vmem:[#allocation2 + $0x1a0] sm:$0xff]
    %v146 = vld [vmem:[#allocation2 + $0x1a8] sm:$0xff]
    %v147 = vld [vmem:[#allocation2 + $0x1b0] sm:$0xff]
    %v148 = vld [vmem:[#allocation2 + $0x1b8] sm:$0xff]
    %v149 = vld [vmem:[#allocation2 + $0x1c0] sm:$0xff]
    %v150 = vld [vmem:[#allocation2 + $0x1c8] sm:$0xff]
    %v151 = vld [vmem:[#allocation2 + $0x1d0] sm:$0xff]
    %v152 = vld [vmem:[#allocation2 + $0x1d8] sm:$0xff]
    %v153 = vld [vmem:[#allocation2 + $0x1e0] sm:$0xff]
    %v154 = vld [vmem:[#allocation2 + $0x1e8] sm:$0xff]
    %v155 = vld [vmem:[#allocation2 + $0x1f0] sm:$0xff]
    %v156 = vld [vmem:[#allocation2 + $0x1f8] sm:$0xff]
    %v157 = vld [vmem:[#allocation2 + $0x200] sm:$0xff]
    %v158 = vld [vmem:[#allocation2 + $0x208] sm:$0xff]
    %v159 = vld [vmem:[#allocation2 + $0x210] sm:$0xff]
    %v160 = vld [vmem:[#allocation2 + $0x218] sm:$0xff]
    %v161 = vld [vmem:[#allocation2 + $0x220] sm:$0xff]
    %v162 = vld [vmem:[#allocation2 + $0x228] sm:$0xff]
    %v163 = vld [vmem:[#allocation2 + $0x230] sm:$0xff]
    %v164 = vld [vmem:[#allocation2 + $0x238] sm:$0xff]
    %v165 = vld [vmem:[#allocation2 + $0x240] sm:$0xff]
    %v166 = vld [vmem:[#allocation2 + $0x248] sm:$0xff]
    %v167 = vld [vmem:[#allocation2 + $0x250] sm:$0xff]
    %v168 = vld [vmem:[#allocation2 + $0x258] sm:$0xff]
    %v169 = vld [vmem:[#allocation2 + $0x260] sm:$0xff]
    %v170 = vld [vmem:[#allocation2 + $0x268] sm:$0xff]
    %v171 = vld [vmem:[#allocation2 + $0x270] sm:$0xff]
    %v172 = vld [vmem:[#allocation2 + $0x278] sm:$0xff]
    %v173 = vld [vmem:[#allocation2 + $0x280] sm:$0xff]
    %v174 = vld [vmem:[#allocation2 + $0x288] sm:$0x3]
    %v175 = vld [vmem:[#allocation2 + $0x290] sm:$0x3]
    %v176 = vld [vmem:[#allocation2 + $0x298] sm:$0x3]
    %vm177 = vcmask 736256
    %v179 = vsel %vm177, %v92, 0
    %vm181 = vcmask 1041408
    %v183 = vsel %vm181, %v174, 0
    %v186 = vsel %vm181, %v175, 0
    %v189 = vsel %vm181, %v176, 0
    %191 = vmatpush.msra.mxu0 %v138
    %192 = vmatpush.msra.mxu0 %v135
    %193 = vmatpush.msra.mxu0 %v132
    %194 = vmatpush.msra.mxu0 %v129
    %195 = vmatpush.msra.mxu0 %v126
    %196 = vmatpush.msra.mxu0 %v123
    %197 = vmatpush.msra.mxu0 %v120
    %198 = vmatpush.msra.mxu0 %v117
    %199 = vmatpush.msra.mxu0 %v114
    %200 = vmatpush.msra.mxu0 %v111
    %201 = vmatpush.msra.mxu0 %v108
    %202 = vmatpush.msra.mxu0 %v105
    %203 = vmatpush.msra.mxu0 %v102
    %204 = vmatpush.msra.mxu0 %v99
    %205 = vmatpush.msra.mxu0 %v96
    %206 = vmatpush.msra.mxu0 %v93
    %207 = vmatmul.f32.gmra.mxu0 %v91
    %v208 = vpop.f32.mrf.mxu0
    %v209 = vadd.f32 0.0, %v208
    %210 = vdwg.mxu0
    %211 = vmatpush.msra.mxu0 0.0
    %212 = vmatpush.msra.mxu0 0.0
    %213 = vmatpush.msra.mxu0 0.0
    %214 = vmatpush.msra.mxu0 0.0
    %215 = vmatpush.msra.mxu0 %v183
    %216 = vmatpush.msra.mxu0 %v171
    %217 = vmatpush.msra.mxu0 %v168
    %218 = vmatpush.msra.mxu0 %v165
    %219 = vmatpush.msra.mxu0 %v162
    %220 = vmatpush.msra.mxu0 %v159
    %221 = vmatpush.msra.mxu0 %v156
    %222 = vmatpush.msra.mxu0 %v153
    %223 = vmatpush.msra.mxu0 %v150
    %224 = vmatpush.msra.mxu0 %v147
    %225 = vmatpush.msra.mxu0 %v144
    %226 = vmatpush.msra.mxu0 %v141
    %227 = vmatmul.f32.gmra.mxu0 %v179
    %v228 = vpop.f32.mrf.mxu0
    %v229 = vadd.f32 %v209, %v228
    %230 = vdwg.mxu0
    %231 = vmatpush.msra.mxu0 %v139
    %232 = vmatpush.msra.mxu0 %v136
    %233 = vmatpush.msra.mxu0 %v133
    %234 = vmatpush.msra.mxu0 %v130
    %235 = vmatpush.msra.mxu0 %v127
    %236 = vmatpush.msra.mxu0 %v124
    %237 = vmatpush.msra.mxu0 %v121
    %238 = vmatpush.msra.mxu0 %v118
    %239 = vmatpush.msra.mxu0 %v115
    %240 = vmatpush.msra.mxu0 %v112
    %241 = vmatpush.msra.mxu0 %v109
    %242 = vmatpush.msra.mxu0 %v106
    %243 = vmatpush.msra.mxu0 %v103
    %244 = vmatpush.msra.mxu0 %v100
    %245 = vmatpush.msra.mxu0 %v97
    %246 = vmatpush.msra.mxu0 %v94
    %247 = vmatmul.f32.gmra.mxu0 %v91
    %v248 = vpop.f32.mrf.mxu0
    %v249 = vadd.f32 0.0, %v248
    %250 = vdwg.mxu0
    %251 = vmatpush.msra.mxu0 0.0
    %252 = vmatpush.msra.mxu0 0.0
    %253 = vmatpush.msra.mxu0 0.0
    %254 = vmatpush.msra.mxu0 0.0
    %255 = vmatpush.msra.mxu0 %v186
    %256 = vmatpush.msra.mxu0 %v172
    %257 = vmatpush.msra.mxu0 %v169
    %258 = vmatpush.msra.mxu0 %v166
    %259 = vmatpush.msra.mxu0 %v163
    %260 = vmatpush.msra.mxu0 %v160
    %261 = vmatpush.msra.mxu0 %v157
    %262 = vmatpush.msra.mxu0 %v154
    %263 = vmatpush.msra.mxu0 %v151
    %264 = vmatpush.msra.mxu0 %v148
    %265 = vmatpush.msra.mxu0 %v145
    %266 = vmatpush.msra.mxu0 %v142
    %267 = vmatmul.f32.gmra.mxu0 %v179
    %v268 = vpop.f32.mrf.mxu0
    %v269 = vadd.f32 %v249, %v268
    %270 = vdwg.mxu0
    %271 = vmatpush.msra.mxu0 %v140
    %272 = vmatpush.msra.mxu0 %v137
    %273 = vmatpush.msra.mxu0 %v134
    %274 = vmatpush.msra.mxu0 %v131
    %275 = vmatpush.msra.mxu0 %v128
    %276 = vmatpush.msra.mxu0 %v125
    %277 = vmatpush.msra.mxu0 %v122
    %278 = vmatpush.msra.mxu0 %v119
    %279 = vmatpush.msra.mxu0 %v116
    %280 = vmatpush.msra.mxu0 %v113
    %281 = vmatpush.msra.mxu0 %v110
    %282 = vmatpush.msra.mxu0 %v107
    %283 = vmatpush.msra.mxu0 %v104
    %284 = vmatpush.msra.mxu0 %v101
    %285 = vmatpush.msra.mxu0 %v98
    %286 = vmatpush.msra.mxu0 %v95
    %287 = vmatmul.f32.gmra.mxu0 %v91
    %v288 = vpop.f32.mrf.mxu0
    %v289 = vadd.f32 0.0, %v288
    %290 = vdwg.mxu0
    %291 = vmatpush.msra.mxu0 0.0
    %292 = vmatpush.msra.mxu0 0.0
    %293 = vmatpush.msra.mxu0 0.0
    %294 = vmatpush.msra.mxu0 0.0
    %295 = vmatpush.msra.mxu0 %v189
    %296 = vmatpush.msra.mxu0 %v173
    %297 = vmatpush.msra.mxu0 %v170
    %298 = vmatpush.msra.mxu0 %v167
    %299 = vmatpush.msra.mxu0 %v164
    %300 = vmatpush.msra.mxu0 %v161
    %301 = vmatpush.msra.mxu0 %v158
    %302 = vmatpush.msra.mxu0 %v155
    %303 = vmatpush.msra.mxu0 %v152
    %304 = vmatpush.msra.mxu0 %v149
    %305 = vmatpush.msra.mxu0 %v146
    %306 = vmatpush.msra.mxu0 %v143
    %307 = vmatmul.f32.gmra.mxu0 %v179
    %v308 = vpop.f32.mrf.mxu0
    %v309 = vadd.f32 %v289, %v308
    %310 = vdwg.mxu0
    %v312 = vrot.slane %v229, 3
    %313 = vrot.lane.b32.xlu0 %v312, 90
    %v314 = vpop.permute.xlu0 %313
    %v316 = vsel %vm177, %v229, %v314
    %318 = vrot.lane.b32.xlu0 %v229, 38
    %v319 = vpop.permute.xlu0 %318
    %320 = vrot.lane.b32.xlu0 %v269, 38
    %v321 = vpop.permute.xlu0 %320
    %vm322 = vcmask 310272
    %v323 = vsel %vm322, %v319, %v321
    %v325 = vrot.slane %v269, 3
    %v327 = vsel %vm177, %v323, %v312
    %329 = vrot.lane.b32.xlu0 %v269, 76
    %v330 = vpop.permute.xlu0 %329
    %331 = vrot.lane.b32.xlu0 %v309, 76
    %v332 = vpop.permute.xlu0 %331
    %vm333 = vcmask 621568
    %v334 = vsel %vm333, %v330, %v332
    %v336 = vrot.slane %v309, 3
    %337 = vrot.lane.b32.xlu0 %v325, 38
    %v338 = vpop.permute.xlu0 %337
    %339 = vrot.lane.b32.xlu0 %v336, 38
    %v340 = vpop.permute.xlu0 %339
    %v341 = vsel %vm322, %v338, %v340
    %v343 = vsel %vm177, %v334, %v338
    %v345 = vrot.slane %v327, 5
    %v346 = vrot.slane %v325, 5
    %v350 = vrot.slane %v343, 2
    %v351 = vrot.slane %v341, 2
    %vm354 = vcmask 1042432
    %v355 = vsel %vm354, %v316, %v345
    %v356 = vsel %vm354, %v314, %v346
    %vm357 = vcmask 1045504
    %v358 = vsel %vm357, %v355, %v350
    %v359 = vsel %vm357, %v356, %v351
    %v360 = vld [vmem:[%s1] sm:$0xff]
    %v361 = vld [vmem:[%s1 + $0x8] sm:$0xff]
    %v362 = vld [vmem:[%s1 + $0x10] sm:$0x3]
    %v363 = vld [vmem:[%s2] sm:$0xff]
    %v364 = vld [vmem:[%s2 + $0x8] sm:$0xff]
    %v365 = vld [vmem:[%s2 + $0x10] sm:$0x3]
    %367 = vset.pattern.permute.xlu0 0
    %368 = vperm.xlu0 %367, %v363
    %v369 = vpop.permute.xlu0 %368
    %372 = vset.pattern.permute.xlu0 0
    %373 = vperm.xlu0 %372, %v364
    %v374 = vpop.permute.xlu0 %373
    %377 = vset.pattern.permute.xlu0 0
    %378 = vperm.xlu0 %377, %v365
    %v379 = vpop.permute.xlu0 %378
    %vm381 = vcmask 72704
    %v383 = vsel %vm381, %v360, 0
    %v386 = vsel %vm381, %v361, 0
    %v389 = vsel %vm381, %v362, 0
    %vm391 = vcmask 1040384
    %v392 = vsel %vm391, %v350, 0
    %v394 = vsel %vm391, %v351, 0
    %396 = vmatpush.msra.mxu0 0.0
    %397 = vmatpush.msra.mxu0 0.0
    %398 = vmatpush.msra.mxu0 0.0
    %399 = vmatpush.msra.mxu0 0.0
    %400 = vmatpush.msra.mxu0 0.0
    %401 = vmatpush.msra.mxu0 0.0
    %402 = vmatpush.msra.mxu0 0.0
    %403 = vmatpush.msra.mxu0 0.0
    %404 = vmatpush.msra.mxu0 0.0
    %405 = vmatpush.msra.mxu0 0.0
    %406 = vmatpush.msra.mxu0 0.0
    %407 = vmatpush.msra.mxu0 0.0
    %408 = vmatpush.msra.mxu0 0.0
    %409 = vmatpush.msra.mxu0 0.0
    %410 = vmatpush.msra.mxu0 %v392
    %411 = vmatpush.msra.mxu0 %v358
    %412 = vmatmul.f32.gmra.mxu0 %v383
    %v413 = vpop.f32.mrf.mxu0
    %v414 = vadd.f32 %v369, %v413
    %415 = vmatmul.f32.gmra.mxu0 %v386
    %v416 = vpop.f32.mrf.mxu0
    %v417 = vadd.f32 %v374, %v416
    %418 = vmatmul.f32.gmra.mxu0 %v389
    %v419 = vpop.f32.mrf.mxu0
    %v420 = vadd.f32 %v379, %v419
    %421 = vdwg.mxu0
    %422 = vmatpush.msra.mxu0 0.0
    %423 = vmatpush.msra.mxu0 0.0
    %424 = vmatpush.msra.mxu0 0.0
    %425 = vmatpush.msra.mxu0 0.0
    %426 = vmatpush.msra.mxu0 0.0
    %427 = vmatpush.msra.mxu0 0.0
    %428 = vmatpush.msra.mxu0 0.0
    %429 = vmatpush.msra.mxu0 0.0
    %430 = vmatpush.msra.mxu0 0.0
    %431 = vmatpush.msra.mxu0 0.0
    %432 = vmatpush.msra.mxu0 0.0
    %433 = vmatpush.msra.mxu0 0.0
    %434 = vmatpush.msra.mxu0 0.0
    %435 = vmatpush.msra.mxu0 0.0
    %436 = vmatpush.msra.mxu0 %v394
    %437 = vmatpush.msra.mxu0 %v359
    %438 = vmatmul.f32.gmra.mxu0 %v383
    %v439 = vpop.f32.mrf.mxu0
    %v440 = vadd.f32 %v369, %v439
    %441 = vmatmul.f32.gmra.mxu0 %v386
    %v442 = vpop.f32.mrf.mxu0
    %v443 = vadd.f32 %v374, %v442
    %444 = vmatmul.f32.gmra.mxu0 %v389
    %v445 = vpop.f32.mrf.mxu0
    %v446 = vadd.f32 %v379, %v445
    %447 = vdwg.mxu0
    %v448 = vmul.f32 %v414, 0.5
    %v449 = vmul.f32 %v440, 0.5
    %v450 = vmul.f32 %v417, 0.5
    %v451 = vmul.f32 %v443, 0.5
    %v452 = vmul.f32 %v420, 0.5
    %v453 = vmul.f32 %v446, 0.5
    %v454 = vmul.f32 %v414, 0.70710677
    %v455 = vmul.f32 %v440, 0.70710677
    %v456 = vmul.f32 %v417, 0.70710677
    %v457 = vmul.f32 %v443, 0.70710677
    %v458 = vmul.f32 %v420, 0.70710677
    %v459 = vmul.f32 %v446, 0.70710677
    %v460 = vand.u32 2147483647, %v454
    %v461 = vand.u32 2147483647, %v455
    %v462 = vand.u32 2147483647, %v456
    %v463 = vand.u32 2147483647, %v457
    %v464 = vand.u32 2147483647, %v458
    %v465 = vand.u32 2147483647, %v459
    %v466 = vmul.f32 %v460, 0.3275911
    %v467 = vmul.f32 %v461, 0.3275911
    %v468 = vmul.f32 %v462, 0.3275911
    %v469 = vmul.f32 %v463, 0.3275911
    %v470 = vmul.f32 %v464, 0.3275911
    %v471 = vmul.f32 %v465, 0.3275911
    %v472 = vadd.f32 %v466, 1.0
    %v473 = vadd.f32 %v467, 1.0
    %v474 = vadd.f32 %v468, 1.0
    %v475 = vadd.f32 %v469, 1.0
    %v476 = vadd.f32 %v470, 1.0
    %v477 = vadd.f32 %v471, 1.0
    %v478 = vrcp.pop %v472
    %v479 = vrcp.pop %v473
    %v480 = vrcp.pop %v474
    %v481 = vrcp.pop %v475
    %v482 = vrcp.pop %v476
    %v483 = vrcp.pop %v477
    %v484 = vmul.f32 %v478, 1.0614054
    %v485 = vmul.f32 %v479, 1.0614054
    %v486 = vmul.f32 %v480, 1.0614054
    %v487 = vmul.f32 %v481, 1.0614054
    %v488 = vmul.f32 %v482, 1.0614054
    %v489 = vmul.f32 %v483, 1.0614054
    %v490 = vadd.f32 %v484, -1.4531521
    %v491 = vadd.f32 %v485, -1.4531521
    %v492 = vadd.f32 %v486, -1.4531521
    %v493 = vadd.f32 %v487, -1.4531521
    %v494 = vadd.f32 %v488, -1.4531521
    %v495 = vadd.f32 %v489, -1.4531521
    %v496 = vmul.f32 %v478, %v490
    %v497 = vmul.f32 %v479, %v491
    %v498 = vmul.f32 %v480, %v492
    %v499 = vmul.f32 %v481, %v493
    %v500 = vmul.f32 %v482, %v494
    %v501 = vmul.f32 %v483, %v495
    %v502 = vadd.f32 %v496, 1.4214138
    %v503 = vadd.f32 %v497, 1.4214138
    %v504 = vadd.f32 %v498, 1.4214138
    %v505 = vadd.f32 %v499, 1.4214138
    %v506 = vadd.f32 %v500, 1.4214138
    %v507 = vadd.f32 %v501, 1.4214138
    %v508 = vmul.f32 %v478, %v502
    %v509 = vmul.f32 %v479, %v503
    %v510 = vmul.f32 %v480, %v504
    %v511 = vmul.f32 %v481, %v505
    %v512 = vmul.f32 %v482, %v506
    %v513 = vmul.f32 %v483, %v507
    %v514 = vadd.f32 %v508, -0.28449672
    %v515 = vadd.f32 %v509, -0.28449672
    %v516 = vadd.f32 %v510, -0.28449672
    %v517 = vadd.f32 %v511, -0.28449672
    %v518 = vadd.f32 %v512, -0.28449672
    %v519 = vadd.f32 %v513, -0.28449672
    %v520 = vmul.f32 %v478, %v514
    %v521 = vmul.f32 %v479, %v515
    %v522 = vmul.f32 %v480, %v516
    %v523 = vmul.f32 %v481, %v517
    %v524 = vmul.f32 %v482, %v518
    %v525 = vmul.f32 %v483, %v519
    %v526 = vadd.f32 %v520, 0.2548296
    %v527 = vadd.f32 %v521, 0.2548296
    %v528 = vadd.f32 %v522, 0.2548296
    %v529 = vadd.f32 %v523, 0.2548296
    %v530 = vadd.f32 %v524, 0.2548296
    %v531 = vadd.f32 %v525, 0.2548296
    %v532 = vmul.f32 %v478, %v526
    %v533 = vmul.f32 %v479, %v527
    %v534 = vmul.f32 %v480, %v528
    %v535 = vmul.f32 %v481, %v529
    %v536 = vmul.f32 %v482, %v530
    %v537 = vmul.f32 %v483, %v531
    %v538 = vsub.f32 0.0, %v460
    %v539 = vsub.f32 0.0, %v461
    %v540 = vsub.f32 0.0, %v462
    %v541 = vsub.f32 0.0, %v463
    %v542 = vsub.f32 0.0, %v464
    %v543 = vsub.f32 0.0, %v465
    %v544 = vmul.f32 %v538, %v460
    %v545 = vmul.f32 %v539, %v461
    %v546 = vmul.f32 %v540, %v462
    %v547 = vmul.f32 %v541, %v463
    %v548 = vmul.f32 %v542, %v464
    %v549 = vmul.f32 %v543, %v465
    %v550 = vmul.f32 %v544, 1.442695
    %v551 = vpow.pop %v550
    %v552 = vmul.f32 %v545, 1.442695
    %v553 = vpow.pop %v552
    %v554 = vmul.f32 %v546, 1.442695
    %v555 = vpow.pop %v554
    %v556 = vmul.f32 %v547, 1.442695
    %v557 = vpow.pop %v556
    %v558 = vmul.f32 %v548, 1.442695
    %v559 = vpow.pop %v558
    %v560 = vmul.f32 %v549, 1.442695
    %v561 = vpow.pop %v560
    %v562 = vmul.f32 %v532, %v551
    %v563 = vmul.f32 %v533, %v553
    %v564 = vmul.f32 %v534, %v555
    %v565 = vmul.f32 %v535, %v557
    %v566 = vmul.f32 %v536, %v559
    %v567 = vmul.f32 %v537, %v561
    %v568 = vsub.f32 1.0, %v562
    %v569 = vsub.f32 1.0, %v563
    %v570 = vsub.f32 1.0, %v564
    %v571 = vsub.f32 1.0, %v565
    %v572 = vsub.f32 1.0, %v566
    %v573 = vsub.f32 1.0, %v567
    %vm574 = vcmp.lt.f32.partialorder %v454, 0.0
    %vm575 = vcmp.lt.f32.partialorder %v455, 0.0
    %vm576 = vcmp.lt.f32.partialorder %v456, 0.0
    %vm577 = vcmp.lt.f32.partialorder %v457, 0.0
    %vm578 = vcmp.lt.f32.partialorder %v458, 0.0
    %vm579 = vcmp.lt.f32.partialorder %v459, 0.0
    %v580 = vsub.f32 0.0, %v568
    %v581 = vsub.f32 0.0, %v569
    %v582 = vsub.f32 0.0, %v570
    %v583 = vsub.f32 0.0, %v571
    %v584 = vsub.f32 0.0, %v572
    %v585 = vsub.f32 0.0, %v573
    %v586 = vsel %vm574, %v580, %v568
    %v587 = vsel %vm575, %v581, %v569
    %v588 = vsel %vm576, %v582, %v570
    %v589 = vsel %vm577, %v583, %v571
    %v590 = vsel %vm578, %v584, %v572
    %v591 = vsel %vm579, %v585, %v573
    %v592 = vadd.f32 %v586, 1.0
    %v593 = vadd.f32 %v587, 1.0
    %v594 = vadd.f32 %v588, 1.0
    %v595 = vadd.f32 %v589, 1.0
    %v596 = vadd.f32 %v590, 1.0
    %v597 = vadd.f32 %v591, 1.0
    %v598 = vmul.f32 %v448, %v592
    %v599 = vmul.f32 %v449, %v593
    %v600 = vmul.f32 %v450, %v594
    %v601 = vmul.f32 %v451, %v595
    %v602 = vmul.f32 %v452, %v596
    %v603 = vmul.f32 %v453, %v597
    %v604 = vlaneseq
    %v605 = vand.u32 %v604, 127
    %v606 = vadd.s32 %v605, 128
    %vm607 = vcmp.eq.s32.totalorder %v605, 90
    %vm608 = vcmp.eq.s32.totalorder %v606, 90
    %615 = vrot.lane.b32.xlu0 %v598, 1
    %v616 = vpop.permute.xlu0 %615
    %617 = vrot.lane.b32.xlu0 %v599, 1
    %v618 = vpop.permute.xlu0 %617
    %619 = vrot.lane.b32.xlu0 %v600, 1
    %v620 = vpop.permute.xlu0 %619
    %621 = vrot.lane.b32.xlu0 %v601, 1
    %v622 = vpop.permute.xlu0 %621
    %623 = vrot.lane.b32.xlu0 %v602, 1
    %v624 = vpop.permute.xlu0 %623
    %625 = vrot.lane.b32.xlu0 %v603, 1
    %v626 = vpop.permute.xlu0 %625
    %vm627 = vcmask 7168
    %v628 = vsel %vm627, %v616, %v618
    %v629 = vsel %vm627, %v620, %v622
    %v630 = vsel %vm627, %v624, %v626
    %v637 = vsel %vm627, 0.0, %v616
    %v638 = vsel %vm627, 0.0, %v620
    %v639 = vsel %vm627, 0.0, %v624
    %v640 = vsel %vm607, 0.0, %v637
    %v641 = vsel %vm608, 0.0, %v628
    %v642 = vsel %vm607, 0.0, %v638
    %v643 = vsel %vm608, 0.0, %v629
    %v644 = vsel %vm607, 0.0, %v639
    %v645 = vsel %vm608, 0.0, %v630
    %vm646 = vcmp.eq.s32.totalorder %v605, 89
    %vm647 = vcmp.eq.s32.totalorder %v606, 89
    %648 = vrot.lane.b32.xlu0 %v598, 127
    %v649 = vpop.permute.xlu0 %648
    %650 = vrot.lane.b32.xlu0 %v599, 127
    %v651 = vpop.permute.xlu0 %650
    %652 = vrot.lane.b32.xlu0 %v600, 127
    %v653 = vpop.permute.xlu0 %652
    %654 = vrot.lane.b32.xlu0 %v601, 127
    %v655 = vpop.permute.xlu0 %654
    %656 = vrot.lane.b32.xlu0 %v602, 127
    %v657 = vpop.permute.xlu0 %656
    %658 = vrot.lane.b32.xlu0 %v603, 127
    %v659 = vpop.permute.xlu0 %658
    %v660 = vsel %vm77, %v649, %v651
    %v661 = vsel %vm77, %v653, %v655
    %v662 = vsel %vm77, %v657, %v659
    %vm669 = vcmask 416768
    %v670 = vsel %vm669, %v651, 0.0
    %v671 = vsel %vm669, %v655, 0.0
    %v672 = vsel %vm669, %v659, 0.0
    %v673 = vsel %vm646, 0.0, %v660
    %v674 = vsel %vm647, 0.0, %v670
    %v675 = vsel %vm646, 0.0, %v661
    %v676 = vsel %vm647, 0.0, %v671
    %v677 = vsel %vm646, 0.0, %v662
    %v678 = vsel %vm647, 0.0, %v672
    %v679 = vrot.slane %v598, 6
    %v680 = vrot.slane %v599, 6
    %v681 = vrot.slane %v600, 6
    %v682 = vsel %vm181, %v679, %v681
    %v683 = vrot.slane %v601, 6
    %v684 = vsel %vm181, %v680, %v683
    %v685 = vrot.slane %v602, 6
    %v686 = vsel %vm181, %v681, %v685
    %v687 = vrot.slane %v603, 6
    %v688 = vsel %vm181, %v683, %v687
    %vm701 = vcmask 1043456
    %v702 = vrot.slane %v673, 4
    %v703 = vrot.slane %v674, 4
    %v704 = vrot.slane %v675, 4
    %v705 = vsel %vm701, %v702, %v704
    %v706 = vrot.slane %v676, 4
    %v707 = vsel %vm701, %v703, %v706
    %v708 = vrot.slane %v677, 4
    %v709 = vsel %vm701, %v704, %v708
    %v710 = vrot.slane %v678, 4
    %v711 = vsel %vm701, %v706, %v710
    %v716 = vsel %vm181, %v644, %v679
    %v717 = vsel %vm181, %v645, %v680
    %v718 = vsel %vm701, %v686, %v702
    %v719 = vsel %vm701, %v688, %v703
    %v720 = vld [vmem:[%s3] sm:$0xff]
    %v721 = vld [vmem:[%s3 + $0x8] sm:$0xff]
    %v722 = vld [vmem:[%s3 + $0x10] sm:$0xff]
    %v723 = vld [vmem:[%s3 + $0x18] sm:$0xff]
    %v724 = vld [vmem:[%s3 + $0x20] sm:$0xff]
    %v725 = vld [vmem:[%s3 + $0x28] sm:$0xff]
    %v726 = vld [vmem:[%s3 + $0x30] sm:$0xff]
    %v727 = vld [vmem:[%s3 + $0x38] sm:$0xff]
    %v728 = vld [vmem:[%s4] sm:$0xff]
    %v729 = vld [vmem:[%s4 + $0x8] sm:$0xff]
    %v730 = vld [vmem:[%s4 + $0x10] sm:$0xff]
    %v731 = vld [vmem:[%s4 + $0x18] sm:$0xff]
    %v732 = vld [vmem:[%s4 + $0x20] sm:$0xff]
    %v733 = vld [vmem:[%s4 + $0x28] sm:$0xff]
    %v734 = vld [vmem:[%s4 + $0x30] sm:$0xff]
    %v735 = vld [vmem:[%s4 + $0x38] sm:$0xff]
    %737 = vset.pattern.permute.xlu0 0
    %738 = vperm.xlu0 %737, %v728
    %v739 = vpop.permute.xlu0 %738
    %742 = vset.pattern.permute.xlu0 0
    %743 = vperm.xlu0 %742, %v729
    %v744 = vpop.permute.xlu0 %743
    %747 = vset.pattern.permute.xlu0 0
    %748 = vperm.xlu0 %747, %v730
    %v749 = vpop.permute.xlu0 %748
    %752 = vset.pattern.permute.xlu0 0
    %753 = vperm.xlu0 %752, %v731
    %v754 = vpop.permute.xlu0 %753
    %757 = vset.pattern.permute.xlu0 0
    %758 = vperm.xlu0 %757, %v732
    %v759 = vpop.permute.xlu0 %758
    %762 = vset.pattern.permute.xlu0 0
    %763 = vperm.xlu0 %762, %v733
    %v764 = vpop.permute.xlu0 %763
    %767 = vset.pattern.permute.xlu0 0
    %768 = vperm.xlu0 %767, %v734
    %v769 = vpop.permute.xlu0 %768
    %772 = vset.pattern.permute.xlu0 0
    %773 = vperm.xlu0 %772, %v735
    %v774 = vpop.permute.xlu0 %773
    %vm776 = vcmask 441344
    %v778 = vsel %vm776, %v720, 0
    %v781 = vsel %vm776, %v721, 0
    %v784 = vsel %vm776, %v722, 0
    %v787 = vsel %vm776, %v723, 0
    %v790 = vsel %vm776, %v724, 0
    %v793 = vsel %vm776, %v725, 0
    %v796 = vsel %vm776, %v726, 0
    %v799 = vsel %vm776, %v727, 0
    %v801 = vsel %vm357, %v709, 0
    %v803 = vsel %vm357, %v711, 0
    %805 = vmatpush.msra.mxu0 0.0
    %806 = vmatpush.msra.mxu0 0.0
    %807 = vmatpush.msra.mxu0 0.0
    %808 = vmatpush.msra.mxu0 0.0
    %809 = vmatpush.msra.mxu0 0.0
    %810 = vmatpush.msra.mxu0 0.0
    %811 = vmatpush.msra.mxu0 0.0
    %812 = vmatpush.msra.mxu0 0.0
    %813 = vmatpush.msra.mxu0 0.0
    %814 = vmatpush.msra.mxu0 %v801
    %815 = vmatpush.msra.mxu0 %v705
    %816 = vmatpush.msra.mxu0 %v718
    %817 = vmatpush.msra.mxu0 %v682
    %818 = vmatpush.msra.mxu0 %v716
    %819 = vmatpush.msra.mxu0 %v642
    %820 = vmatpush.msra.mxu0 %v640
    %821 = vmatmul.f32.gmra.mxu0 %v778
    %v822 = vpop.f32.mrf.mxu0
    %v823 = vadd.f32 %v739, %v822
    %824 = vmatmul.f32.gmra.mxu0 %v781
    %v825 = vpop.f32.mrf.mxu0
    %v826 = vadd.f32 %v744, %v825
    %827 = vmatmul.f32.gmra.mxu0 %v784
    %v828 = vpop.f32.mrf.mxu0
    %v829 = vadd.f32 %v749, %v828
    %830 = vmatmul.f32.gmra.mxu0 %v787
    %v831 = vpop.f32.mrf.mxu0
    %v832 = vadd.f32 %v754, %v831
    %833 = vmatmul.f32.gmra.mxu0 %v790
    %v834 = vpop.f32.mrf.mxu0
    %v835 = vadd.f32 %v759, %v834
    %836 = vmatmul.f32.gmra.mxu0 %v793
    %v837 = vpop.f32.mrf.mxu0
    %v838 = vadd.f32 %v764, %v837
    %839 = vmatmul.f32.gmra.mxu0 %v796
    %v840 = vpop.f32.mrf.mxu0
    %v841 = vadd.f32 %v769, %v840
    %842 = vmatmul.f32.gmra.mxu0 %v799
    %v843 = vpop.f32.mrf.mxu0
    %v844 = vadd.f32 %v774, %v843
    %845 = vdwg.mxu0
    %846 = vmatpush.msra.mxu0 0.0
    %847 = vmatpush.msra.mxu0 0.0
    %848 = vmatpush.msra.mxu0 0.0
    %849 = vmatpush.msra.mxu0 0.0
    %850 = vmatpush.msra.mxu0 0.0
    %851 = vmatpush.msra.mxu0 0.0
    %852 = vmatpush.msra.mxu0 0.0
    %853 = vmatpush.msra.mxu0 0.0
    %854 = vmatpush.msra.mxu0 0.0
    %855 = vmatpush.msra.mxu0 %v803
    %856 = vmatpush.msra.mxu0 %v707
    %857 = vmatpush.msra.mxu0 %v719
    %858 = vmatpush.msra.mxu0 %v684
    %859 = vmatpush.msra.mxu0 %v717
    %860 = vmatpush.msra.mxu0 %v643
    %861 = vmatpush.msra.mxu0 %v641
    %862 = vmatmul.f32.gmra.mxu0 %v778
    %v863 = vpop.f32.mrf.mxu0
    %v864 = vadd.f32 %v739, %v863
    %865 = vmatmul.f32.gmra.mxu0 %v781
    %v866 = vpop.f32.mrf.mxu0
    %v867 = vadd.f32 %v744, %v866
    %868 = vmatmul.f32.gmra.mxu0 %v784
    %v869 = vpop.f32.mrf.mxu0
    %v870 = vadd.f32 %v749, %v869
    %871 = vmatmul.f32.gmra.mxu0 %v787
    %v872 = vpop.f32.mrf.mxu0
    %v873 = vadd.f32 %v754, %v872
    %874 = vmatmul.f32.gmra.mxu0 %v790
    %v875 = vpop.f32.mrf.mxu0
    %v876 = vadd.f32 %v759, %v875
    %877 = vmatmul.f32.gmra.mxu0 %v793
    %v878 = vpop.f32.mrf.mxu0
    %v879 = vadd.f32 %v764, %v878
    %880 = vmatmul.f32.gmra.mxu0 %v796
    %v881 = vpop.f32.mrf.mxu0
    %v882 = vadd.f32 %v769, %v881
    %883 = vmatmul.f32.gmra.mxu0 %v799
    %v884 = vpop.f32.mrf.mxu0
    %v885 = vadd.f32 %v774, %v884
    %886 = vdwg.mxu0
    %v887 = vmul.f32 %v823, 0.5
    %v888 = vmul.f32 %v864, 0.5
    %v889 = vmul.f32 %v826, 0.5
    %v890 = vmul.f32 %v867, 0.5
    %v891 = vmul.f32 %v829, 0.5
    %v892 = vmul.f32 %v870, 0.5
    %v893 = vmul.f32 %v832, 0.5
    %v894 = vmul.f32 %v873, 0.5
    %v895 = vmul.f32 %v835, 0.5
    %v896 = vmul.f32 %v876, 0.5
    %v897 = vmul.f32 %v838, 0.5
    %v898 = vmul.f32 %v879, 0.5
    %v899 = vmul.f32 %v841, 0.5
    %v900 = vmul.f32 %v882, 0.5
    %v901 = vmul.f32 %v844, 0.5
    %v902 = vmul.f32 %v885, 0.5
    %v903 = vmul.f32 %v823, 0.70710677
    %v904 = vmul.f32 %v864, 0.70710677
    %v905 = vmul.f32 %v826, 0.70710677
    %v906 = vmul.f32 %v867, 0.70710677
    %v907 = vmul.f32 %v829, 0.70710677
    %v908 = vmul.f32 %v870, 0.70710677
    %v909 = vmul.f32 %v832, 0.70710677
    %v910 = vmul.f32 %v873, 0.70710677
    %v911 = vmul.f32 %v835, 0.70710677
    %v912 = vmul.f32 %v876, 0.70710677
    %v913 = vmul.f32 %v838, 0.70710677
    %v914 = vmul.f32 %v879, 0.70710677
    %v915 = vmul.f32 %v841, 0.70710677
    %v916 = vmul.f32 %v882, 0.70710677
    %v917 = vmul.f32 %v844, 0.70710677
    %v918 = vmul.f32 %v885, 0.70710677
    %v919 = vand.u32 2147483647, %v903
    %v920 = vand.u32 2147483647, %v904
    %v921 = vand.u32 2147483647, %v905
    %v922 = vand.u32 2147483647, %v906
    %v923 = vand.u32 2147483647, %v907
    %v924 = vand.u32 2147483647, %v908
    %v925 = vand.u32 2147483647, %v909
    %v926 = vand.u32 2147483647, %v910
    %v927 = vand.u32 2147483647, %v911
    %v928 = vand.u32 2147483647, %v912
    %v929 = vand.u32 2147483647, %v913
    %v930 = vand.u32 2147483647, %v914
    %v931 = vand.u32 2147483647, %v915
    %v932 = vand.u32 2147483647, %v916
    %v933 = vand.u32 2147483647, %v917
    %v934 = vand.u32 2147483647, %v918
    %v935 = vmul.f32 %v919, 0.3275911
    %v936 = vmul.f32 %v920, 0.3275911
    %v937 = vmul.f32 %v921, 0.3275911
    %v938 = vmul.f32 %v922, 0.3275911
    %v939 = vmul.f32 %v923, 0.3275911
    %v940 = vmul.f32 %v924, 0.3275911
    %v941 = vmul.f32 %v925, 0.3275911
    %v942 = vmul.f32 %v926, 0.3275911
    %v943 = vmul.f32 %v927, 0.3275911
    %v944 = vmul.f32 %v928, 0.3275911
    %v945 = vmul.f32 %v929, 0.3275911
    %v946 = vmul.f32 %v930, 0.3275911
    %v947 = vmul.f32 %v931, 0.3275911
    %v948 = vmul.f32 %v932, 0.3275911
    %v949 = vmul.f32 %v933, 0.3275911
    %v950 = vmul.f32 %v934, 0.3275911
    %v951 = vadd.f32 %v935, 1.0
    %v952 = vadd.f32 %v936, 1.0
    %v953 = vadd.f32 %v937, 1.0
    %v954 = vadd.f32 %v938, 1.0
    %v955 = vadd.f32 %v939, 1.0
    %v956 = vadd.f32 %v940, 1.0
    %v957 = vadd.f32 %v941, 1.0
    %v958 = vadd.f32 %v942, 1.0
    %v959 = vadd.f32 %v943, 1.0
    %v960 = vadd.f32 %v944, 1.0
    %v961 = vadd.f32 %v945, 1.0
    %v962 = vadd.f32 %v946, 1.0
    %v963 = vadd.f32 %v947, 1.0
    %v964 = vadd.f32 %v948, 1.0
    %v965 = vadd.f32 %v949, 1.0
    %v966 = vadd.f32 %v950, 1.0
    %v967 = vrcp.pop %v951
    %v968 = vrcp.pop %v952
    %v969 = vrcp.pop %v953
    %v970 = vrcp.pop %v954
    %v971 = vrcp.pop %v955
    %v972 = vrcp.pop %v956
    %v973 = vrcp.pop %v957
    %v974 = vrcp.pop %v958
    %v975 = vrcp.pop %v959
    %v976 = vrcp.pop %v960
    %v977 = vrcp.pop %v961
    %v978 = vrcp.pop %v962
    %v979 = vrcp.pop %v963
    %v980 = vrcp.pop %v964
    %v981 = vrcp.pop %v965
    %v982 = vrcp.pop %v966
    %v983 = vmul.f32 %v967, 1.0614054
    %v984 = vmul.f32 %v968, 1.0614054
    %v985 = vmul.f32 %v969, 1.0614054
    %v986 = vmul.f32 %v970, 1.0614054
    %v987 = vmul.f32 %v971, 1.0614054
    %v988 = vmul.f32 %v972, 1.0614054
    %v989 = vmul.f32 %v973, 1.0614054
    %v990 = vmul.f32 %v974, 1.0614054
    %v991 = vmul.f32 %v975, 1.0614054
    %v992 = vmul.f32 %v976, 1.0614054
    %v993 = vmul.f32 %v977, 1.0614054
    %v994 = vmul.f32 %v978, 1.0614054
    %v995 = vmul.f32 %v979, 1.0614054
    %v996 = vmul.f32 %v980, 1.0614054
    %v997 = vmul.f32 %v981, 1.0614054
    %v998 = vmul.f32 %v982, 1.0614054
    %v999 = vadd.f32 %v983, -1.4531521
    %v1000 = vadd.f32 %v984, -1.4531521
    %v1001 = vadd.f32 %v985, -1.4531521
    %v1002 = vadd.f32 %v986, -1.4531521
    %v1003 = vadd.f32 %v987, -1.4531521
    %v1004 = vadd.f32 %v988, -1.4531521
    %v1005 = vadd.f32 %v989, -1.4531521
    %v1006 = vadd.f32 %v990, -1.4531521
    %v1007 = vadd.f32 %v991, -1.4531521
    %v1008 = vadd.f32 %v992, -1.4531521
    %v1009 = vadd.f32 %v993, -1.4531521
    %v1010 = vadd.f32 %v994, -1.4531521
    %v1011 = vadd.f32 %v995, -1.4531521
    %v1012 = vadd.f32 %v996, -1.4531521
    %v1013 = vadd.f32 %v997, -1.4531521
    %v1014 = vadd.f32 %v998, -1.4531521
    %v1015 = vmul.f32 %v967, %v999
    %v1016 = vmul.f32 %v968, %v1000
    %v1017 = vmul.f32 %v969, %v1001
    %v1018 = vmul.f32 %v970, %v1002
    %v1019 = vmul.f32 %v971, %v1003
    %v1020 = vmul.f32 %v972, %v1004
    %v1021 = vmul.f32 %v973, %v1005
    %v1022 = vmul.f32 %v974, %v1006
    %v1023 = vmul.f32 %v975, %v1007
    %v1024 = vmul.f32 %v976, %v1008
    %v1025 = vmul.f32 %v977, %v1009
    %v1026 = vmul.f32 %v978, %v1010
    %v1027 = vmul.f32 %v979, %v1011
    %v1028 = vmul.f32 %v980, %v1012
    %v1029 = vmul.f32 %v981, %v1013
    %v1030 = vmul.f32 %v982, %v1014
    %v1031 = vadd.f32 %v1015, 1.4214138
    %v1032 = vadd.f32 %v1016, 1.4214138
    %v1033 = vadd.f32 %v1017, 1.4214138
    %v1034 = vadd.f32 %v1018, 1.4214138
    %v1035 = vadd.f32 %v1019, 1.4214138
    %v1036 = vadd.f32 %v1020, 1.4214138
    %v1037 = vadd.f32 %v1021, 1.4214138
    %v1038 = vadd.f32 %v1022, 1.4214138
    %v1039 = vadd.f32 %v1023, 1.4214138
    %v1040 = vadd.f32 %v1024, 1.4214138
    %v1041 = vadd.f32 %v1025, 1.4214138
    %v1042 = vadd.f32 %v1026, 1.4214138
    %v1043 = vadd.f32 %v1027, 1.4214138
    %v1044 = vadd.f32 %v1028, 1.4214138
    %v1045 = vadd.f32 %v1029, 1.4214138
    %v1046 = vadd.f32 %v1030, 1.4214138
    %v1047 = vmul.f32 %v967, %v1031
    %v1048 = vmul.f32 %v968, %v1032
    %v1049 = vmul.f32 %v969, %v1033
    %v1050 = vmul.f32 %v970, %v1034
    %v1051 = vmul.f32 %v971, %v1035
    %v1052 = vmul.f32 %v972, %v1036
    %v1053 = vmul.f32 %v973, %v1037
    %v1054 = vmul.f32 %v974, %v1038
    %v1055 = vmul.f32 %v975, %v1039
    %v1056 = vmul.f32 %v976, %v1040
    %v1057 = vmul.f32 %v977, %v1041
    %v1058 = vmul.f32 %v978, %v1042
    %v1059 = vmul.f32 %v979, %v1043
    %v1060 = vmul.f32 %v980, %v1044
    %v1061 = vmul.f32 %v981, %v1045
    %v1062 = vmul.f32 %v982, %v1046
    %v1063 = vadd.f32 %v1047, -0.28449672
    %v1064 = vadd.f32 %v1048, -0.28449672
    %v1065 = vadd.f32 %v1049, -0.28449672
    %v1066 = vadd.f32 %v1050, -0.28449672
    %v1067 = vadd.f32 %v1051, -0.28449672
    %v1068 = vadd.f32 %v1052, -0.28449672
    %v1069 = vadd.f32 %v1053, -0.28449672
    %v1070 = vadd.f32 %v1054, -0.28449672
    %v1071 = vadd.f32 %v1055, -0.28449672
    %v1072 = vadd.f32 %v1056, -0.28449672
    %v1073 = vadd.f32 %v1057, -0.28449672
    %v1074 = vadd.f32 %v1058, -0.28449672
    %v1075 = vadd.f32 %v1059, -0.28449672
    %v1076 = vadd.f32 %v1060, -0.28449672
    %v1077 = vadd.f32 %v1061, -0.28449672
    %v1078 = vadd.f32 %v1062, -0.28449672
    %v1079 = vmul.f32 %v967, %v1063
    %v1080 = vmul.f32 %v968, %v1064
    %v1081 = vmul.f32 %v969, %v1065
    %v1082 = vmul.f32 %v970, %v1066
    %v1083 = vmul.f32 %v971, %v1067
    %v1084 = vmul.f32 %v972, %v1068
    %v1085 = vmul.f32 %v973, %v1069
    %v1086 = vmul.f32 %v974, %v1070
    %v1087 = vmul.f32 %v975, %v1071
    %v1088 = vmul.f32 %v976, %v1072
    %v1089 = vmul.f32 %v977, %v1073
    %v1090 = vmul.f32 %v978, %v1074
    %v1091 = vmul.f32 %v979, %v1075
    %v1092 = vmul.f32 %v980, %v1076
    %v1093 = vmul.f32 %v981, %v1077
    %v1094 = vmul.f32 %v982, %v1078
    %v1095 = vadd.f32 %v1079, 0.2548296
    %v1096 = vadd.f32 %v1080, 0.2548296
    %v1097 = vadd.f32 %v1081, 0.2548296
    %v1098 = vadd.f32 %v1082, 0.2548296
    %v1099 = vadd.f32 %v1083, 0.2548296
    %v1100 = vadd.f32 %v1084, 0.2548296
    %v1101 = vadd.f32 %v1085, 0.2548296
    %v1102 = vadd.f32 %v1086, 0.2548296
    %v1103 = vadd.f32 %v1087, 0.2548296
    %v1104 = vadd.f32 %v1088, 0.2548296
    %v1105 = vadd.f32 %v1089, 0.2548296
    %v1106 = vadd.f32 %v1090, 0.2548296
    %v1107 = vadd.f32 %v1091, 0.2548296
    %v1108 = vadd.f32 %v1092, 0.2548296
    %v1109 = vadd.f32 %v1093, 0.2548296
    %v1110 = vadd.f32 %v1094, 0.2548296
    %v1111 = vmul.f32 %v967, %v1095
    %v1112 = vmul.f32 %v968, %v1096
    %v1113 = vmul.f32 %v969, %v1097
    %v1114 = vmul.f32 %v970, %v1098
    %v1115 = vmul.f32 %v971, %v1099
    %v1116 = vmul.f32 %v972, %v1100
    %v1117 = vmul.f32 %v973, %v1101
    %v1118 = vmul.f32 %v974, %v1102
    %v1119 = vmul.f32 %v975, %v1103
    %v1120 = vmul.f32 %v976, %v1104
    %v1121 = vmul.f32 %v977, %v1105
    %v1122 = vmul.f32 %v978, %v1106
    %v1123 = vmul.f32 %v979, %v1107
    %v1124 = vmul.f32 %v980, %v1108
    %v1125 = vmul.f32 %v981, %v1109
    %v1126 = vmul.f32 %v982, %v1110
    %v1127 = vsub.f32 0.0, %v919
    %v1128 = vsub.f32 0.0, %v920
    %v1129 = vsub.f32 0.0, %v921
    %v1130 = vsub.f32 0.0, %v922
    %v1131 = vsub.f32 0.0, %v923
    %v1132 = vsub.f32 0.0, %v924
    %v1133 = vsub.f32 0.0, %v925
    %v1134 = vsub.f32 0.0, %v926
    %v1135 = vsub.f32 0.0, %v927
    %v1136 = vsub.f32 0.0, %v928
    %v1137 = vsub.f32 0.0, %v929
    %v1138 = vsub.f32 0.0, %v930
    %v1139 = vsub.f32 0.0, %v931
    %v1140 = vsub.f32 0.0, %v932
    %v1141 = vsub.f32 0.0, %v933
    %v1142 = vsub.f32 0.0, %v934
    %v1143 = vmul.f32 %v1127, %v919
    %v1144 = vmul.f32 %v1128, %v920
    %v1145 = vmul.f32 %v1129, %v921
    %v1146 = vmul.f32 %v1130, %v922
    %v1147 = vmul.f32 %v1131, %v923
    %v1148 = vmul.f32 %v1132, %v924
    %v1149 = vmul.f32 %v1133, %v925
    %v1150 = vmul.f32 %v1134, %v926
    %v1151 = vmul.f32 %v1135, %v927
    %v1152 = vmul.f32 %v1136, %v928
    %v1153 = vmul.f32 %v1137, %v929
    %v1154 = vmul.f32 %v1138, %v930
    %v1155 = vmul.f32 %v1139, %v931
    %v1156 = vmul.f32 %v1140, %v932
    %v1157 = vmul.f32 %v1141, %v933
    %v1158 = vmul.f32 %v1142, %v934
    %v1159 = vmul.f32 %v1143, 1.442695
    %v1160 = vpow.pop %v1159
    %v1161 = vmul.f32 %v1144, 1.442695
    %v1162 = vpow.pop %v1161
    %v1163 = vmul.f32 %v1145, 1.442695
    %v1164 = vpow.pop %v1163
    %v1165 = vmul.f32 %v1146, 1.442695
    %v1166 = vpow.pop %v1165
    %v1167 = vmul.f32 %v1147, 1.442695
    %v1168 = vpow.pop %v1167
    %v1169 = vmul.f32 %v1148, 1.442695
    %v1170 = vpow.pop %v1169
    %v1171 = vmul.f32 %v1149, 1.442695
    %v1172 = vpow.pop %v1171
    %v1173 = vmul.f32 %v1150, 1.442695
    %v1174 = vpow.pop %v1173
    %v1175 = vmul.f32 %v1151, 1.442695
    %v1176 = vpow.pop %v1175
    %v1177 = vmul.f32 %v1152, 1.442695
    %v1178 = vpow.pop %v1177
    %v1179 = vmul.f32 %v1153, 1.442695
    %v1180 = vpow.pop %v1179
    %v1181 = vmul.f32 %v1154, 1.442695
    %v1182 = vpow.pop %v1181
    %v1183 = vmul.f32 %v1155, 1.442695
    %v1184 = vpow.pop %v1183
    %v1185 = vmul.f32 %v1156, 1.442695
    %v1186 = vpow.pop %v1185
    %v1187 = vmul.f32 %v1157, 1.442695
    %v1188 = vpow.pop %v1187
    %v1189 = vmul.f32 %v1158, 1.442695
    %v1190 = vpow.pop %v1189
    %v1191 = vmul.f32 %v1111, %v1160
    %v1192 = vmul.f32 %v1112, %v1162
    %v1193 = vmul.f32 %v1113, %v1164
    %v1194 = vmul.f32 %v1114, %v1166
    %v1195 = vmul.f32 %v1115, %v1168
    %v1196 = vmul.f32 %v1116, %v1170
    %v1197 = vmul.f32 %v1117, %v1172
    %v1198 = vmul.f32 %v1118, %v1174
    %v1199 = vmul.f32 %v1119, %v1176
    %v1200 = vmul.f32 %v1120, %v1178
    %v1201 = vmul.f32 %v1121, %v1180
    %v1202 = vmul.f32 %v1122, %v1182
    %v1203 = vmul.f32 %v1123, %v1184
    %v1204 = vmul.f32 %v1124, %v1186
    %v1205 = vmul.f32 %v1125, %v1188
    %v1206 = vmul.f32 %v1126, %v1190
    %v1207 = vsub.f32 1.0, %v1191
    %v1208 = vsub.f32 1.0, %v1192
    %v1209 = vsub.f32 1.0, %v1193
    %v1210 = vsub.f32 1.0, %v1194
    %v1211 = vsub.f32 1.0, %v1195
    %v1212 = vsub.f32 1.0, %v1196
    %v1213 = vsub.f32 1.0, %v1197
    %v1214 = vsub.f32 1.0, %v1198
    %v1215 = vsub.f32 1.0, %v1199
    %v1216 = vsub.f32 1.0, %v1200
    %v1217 = vsub.f32 1.0, %v1201
    %v1218 = vsub.f32 1.0, %v1202
    %v1219 = vsub.f32 1.0, %v1203
    %v1220 = vsub.f32 1.0, %v1204
    %v1221 = vsub.f32 1.0, %v1205
    %v1222 = vsub.f32 1.0, %v1206
    %vm1223 = vcmp.lt.f32.partialorder %v903, 0.0
    %vm1224 = vcmp.lt.f32.partialorder %v904, 0.0
    %vm1225 = vcmp.lt.f32.partialorder %v905, 0.0
    %vm1226 = vcmp.lt.f32.partialorder %v906, 0.0
    %vm1227 = vcmp.lt.f32.partialorder %v907, 0.0
    %vm1228 = vcmp.lt.f32.partialorder %v908, 0.0
    %vm1229 = vcmp.lt.f32.partialorder %v909, 0.0
    %vm1230 = vcmp.lt.f32.partialorder %v910, 0.0
    %vm1231 = vcmp.lt.f32.partialorder %v911, 0.0
    %vm1232 = vcmp.lt.f32.partialorder %v912, 0.0
    %vm1233 = vcmp.lt.f32.partialorder %v913, 0.0
    %vm1234 = vcmp.lt.f32.partialorder %v914, 0.0
    %vm1235 = vcmp.lt.f32.partialorder %v915, 0.0
    %vm1236 = vcmp.lt.f32.partialorder %v916, 0.0
    %vm1237 = vcmp.lt.f32.partialorder %v917, 0.0
    %vm1238 = vcmp.lt.f32.partialorder %v918, 0.0
    %v1239 = vsub.f32 0.0, %v1207
    %v1240 = vsub.f32 0.0, %v1208
    %v1241 = vsub.f32 0.0, %v1209
    %v1242 = vsub.f32 0.0, %v1210
    %v1243 = vsub.f32 0.0, %v1211
    %v1244 = vsub.f32 0.0, %v1212
    %v1245 = vsub.f32 0.0, %v1213
    %v1246 = vsub.f32 0.0, %v1214
    %v1247 = vsub.f32 0.0, %v1215
    %v1248 = vsub.f32 0.0, %v1216
    %v1249 = vsub.f32 0.0, %v1217
    %v1250 = vsub.f32 0.0, %v1218
    %v1251 = vsub.f32 0.0, %v1219
    %v1252 = vsub.f32 0.0, %v1220
    %v1253 = vsub.f32 0.0, %v1221
    %v1254 = vsub.f32 0.0, %v1222
    %v1255 = vsel %vm1223, %v1239, %v1207
    %v1256 = vsel %vm1224, %v1240, %v1208
    %v1257 = vsel %vm1225, %v1241, %v1209
    %v1258 = vsel %vm1226, %v1242, %v1210
    %v1259 = vsel %vm1227, %v1243, %v1211
    %v1260 = vsel %vm1228, %v1244, %v1212
    %v1261 = vsel %vm1229, %v1245, %v1213
    %v1262 = vsel %vm1230, %v1246, %v1214
    %v1263 = vsel %vm1231, %v1247, %v1215
    %v1264 = vsel %vm1232, %v1248, %v1216
    %v1265 = vsel %vm1233, %v1249, %v1217
    %v1266 = vsel %vm1234, %v1250, %v1218
    %v1267 = vsel %vm1235, %v1251, %v1219
    %v1268 = vsel %vm1236, %v1252, %v1220
    %v1269 = vsel %vm1237, %v1253, %v1221
    %v1270 = vsel %vm1238, %v1254, %v1222
    %v1271 = vadd.f32 %v1255, 1.0
    %v1272 = vadd.f32 %v1256, 1.0
    %v1273 = vadd.f32 %v1257, 1.0
    %v1274 = vadd.f32 %v1258, 1.0
    %v1275 = vadd.f32 %v1259, 1.0
    %v1276 = vadd.f32 %v1260, 1.0
    %v1277 = vadd.f32 %v1261, 1.0
    %v1278 = vadd.f32 %v1262, 1.0
    %v1279 = vadd.f32 %v1263, 1.0
    %v1280 = vadd.f32 %v1264, 1.0
    %v1281 = vadd.f32 %v1265, 1.0
    %v1282 = vadd.f32 %v1266, 1.0
    %v1283 = vadd.f32 %v1267, 1.0
    %v1284 = vadd.f32 %v1268, 1.0
    %v1285 = vadd.f32 %v1269, 1.0
    %v1286 = vadd.f32 %v1270, 1.0
    %v1287 = vmul.f32 %v887, %v1271
    %v1288 = vmul.f32 %v888, %v1272
    %v1289 = vmul.f32 %v889, %v1273
    %v1290 = vmul.f32 %v890, %v1274
    %v1291 = vmul.f32 %v891, %v1275
    %v1292 = vmul.f32 %v892, %v1276
    %v1293 = vmul.f32 %v893, %v1277
    %v1294 = vmul.f32 %v894, %v1278
    %v1295 = vmul.f32 %v895, %v1279
    %v1296 = vmul.f32 %v896, %v1280
    %v1297 = vmul.f32 %v897, %v1281
    %v1298 = vmul.f32 %v898, %v1282
    %v1299 = vmul.f32 %v899, %v1283
    %v1300 = vmul.f32 %v900, %v1284
    %v1301 = vmul.f32 %v901, %v1285
    %v1302 = vmul.f32 %v902, %v1286
    %v1303 = vld [vmem:[%s6] sm:$0xff]
    %v1304 = vld [vmem:[%s6 + $0x8] sm:$0xff]
    %v1305 = vld [vmem:[%s6 + $0x10] sm:$0xff]
    %v1306 = vld [vmem:[%s6 + $0x18] sm:$0xff]
    %v1307 = vld [vmem:[%s6 + $0x20] sm:$0xff]
    %v1308 = vld [vmem:[%s6 + $0x28] sm:$0xff]
    %v1309 = vld [vmem:[%s6 + $0x30] sm:$0xff]
    %v1310 = vld [vmem:[%s6 + $0x38] sm:$0xff]
    %v1311 = vld [vmem:[%s6 + $0x40] sm:$0xff]
    %v1312 = vld [vmem:[%s6 + $0x48] sm:$0xff]
    %v1313 = vld [vmem:[%s6 + $0x50] sm:$0xff]
    %v1314 = vld [vmem:[%s6 + $0x58] sm:$0xff]
    %v1315 = vld [vmem:[%s6 + $0x60] sm:$0xff]
    %v1316 = vld [vmem:[%s6 + $0x68] sm:$0xff]
    %v1317 = vld [vmem:[%s6 + $0x70] sm:$0xff]
    %v1318 = vld [vmem:[%s6 + $0x78] sm:$0xff]
    %v1319 = vld [vmem:[%s6 + $0x80] sm:$0xff]
    %v1320 = vld [vmem:[%s6 + $0x88] sm:$0xff]
    %v1321 = vld [vmem:[%s6 + $0x90] sm:$0xff]
    %v1322 = vld [vmem:[%s6 + $0x98] sm:$0xff]
    %v1323 = vld [vmem:[%s6 + $0xa0] sm:$0xff]
    %v1324 = vld [vmem:[%s6 + $0xa8] sm:$0xff]
    %v1325 = vld [vmem:[%s6 + $0xb0] sm:$0xf]
    %vm1326 = vcmask 424960
    %v1328 = vsel %vm1326, %v1288, 0
    %v1331 = vsel %vm1326, %v1290, 0
    %v1334 = vsel %vm1326, %v1292, 0
    %v1337 = vsel %vm1326, %v1294, 0
    %v1340 = vsel %vm1326, %v1296, 0
    %v1343 = vsel %vm1326, %v1298, 0
    %v1346 = vsel %vm1326, %v1300, 0
    %v1349 = vsel %vm1326, %v1302, 0
    %v1352 = vsel %vm701, %v1325, 0
    %1354 = vmatpush.msra.mxu0 %v1318
    %1355 = vmatpush.msra.mxu0 %v1317
    %1356 = vmatpush.msra.mxu0 %v1316
    %1357 = vmatpush.msra.mxu0 %v1315
    %1358 = vmatpush.msra.mxu0 %v1314
    %1359 = vmatpush.msra.mxu0 %v1313
    %1360 = vmatpush.msra.mxu0 %v1312
    %1361 = vmatpush.msra.mxu0 %v1311
    %1362 = vmatpush.msra.mxu0 %v1310
    %1363 = vmatpush.msra.mxu0 %v1309
    %1364 = vmatpush.msra.mxu0 %v1308
    %1365 = vmatpush.msra.mxu0 %v1307
    %1366 = vmatpush.msra.mxu0 %v1306
    %1367 = vmatpush.msra.mxu0 %v1305
    %1368 = vmatpush.msra.mxu0 %v1304
    %1369 = vmatpush.msra.mxu0 %v1303
    %1370 = vmatmul.f32.gmra.mxu0 %v1287
    %v1371 = vpop.f32.mrf.mxu0
    %v1372 = vadd.f32 0.0, %v1371
    %1373 = vmatmul.f32.gmra.mxu0 %v1289
    %v1374 = vpop.f32.mrf.mxu0
    %v1375 = vadd.f32 0.0, %v1374
    %1376 = vmatmul.f32.gmra.mxu0 %v1291
    %v1377 = vpop.f32.mrf.mxu0
    %v1378 = vadd.f32 0.0, %v1377
    %1379 = vmatmul.f32.gmra.mxu0 %v1293
    %v1380 = vpop.f32.mrf.mxu0
    %v1381 = vadd.f32 0.0, %v1380
    %1382 = vmatmul.f32.gmra.mxu0 %v1295
    %v1383 = vpop.f32.mrf.mxu0
    %v1384 = vadd.f32 0.0, %v1383
    %1385 = vmatmul.f32.gmra.mxu0 %v1297
    %v1386 = vpop.f32.mrf.mxu0
    %v1387 = vadd.f32 0.0, %v1386
    %1388 = vmatmul.f32.gmra.mxu0 %v1299
    %v1389 = vpop.f32.mrf.mxu0
    %v1390 = vadd.f32 0.0, %v1389
    %1391 = vmatmul.f32.gmra.mxu0 %v1301
    %v1392 = vpop.f32.mrf.mxu0
    %v1393 = vadd.f32 0.0, %v1392
    %1394 = vdwg.mxu0
    %1395 = vmatpush.msra.mxu0 0.0
    %1396 = vmatpush.msra.mxu0 0.0
    %1397 = vmatpush.msra.mxu0 0.0
    %1398 = vmatpush.msra.mxu0 0.0
    %1399 = vmatpush.msra.mxu0 0.0
    %1400 = vmatpush.msra.mxu0 0.0
    %1401 = vmatpush.msra.mxu0 0.0
    %1402 = vmatpush.msra.mxu0 0.0
    %1403 = vmatpush.msra.mxu0 0.0
    %1404 = vmatpush.msra.mxu0 %v1352
    %1405 = vmatpush.msra.mxu0 %v1324
    %1406 = vmatpush.msra.mxu0 %v1323
    %1407 = vmatpush.msra.mxu0 %v1322
    %1408 = vmatpush.msra.mxu0 %v1321
    %1409 = vmatpush.msra.mxu0 %v1320
    %1410 = vmatpush.msra.mxu0 %v1319
    %1411 = vmatmul.f32.gmra.mxu0 %v1328
    %v1412 = vpop.f32.mrf.mxu0
    %v1413 = vadd.f32 %v1372, %v1412
    %1414 = vmatmul.f32.gmra.mxu0 %v1331
    %v1415 = vpop.f32.mrf.mxu0
    %v1416 = vadd.f32 %v1375, %v1415
    %1417 = vmatmul.f32.gmra.mxu0 %v1334
    %v1418 = vpop.f32.mrf.mxu0
    %v1419 = vadd.f32 %v1378, %v1418
    %1420 = vmatmul.f32.gmra.mxu0 %v1337
    %v1421 = vpop.f32.mrf.mxu0
    %v1422 = vadd.f32 %v1381, %v1421
    %1423 = vmatmul.f32.gmra.mxu0 %v1340
    %v1424 = vpop.f32.mrf.mxu0
    %v1425 = vadd.f32 %v1384, %v1424
    %1426 = vmatmul.f32.gmra.mxu0 %v1343
    %v1427 = vpop.f32.mrf.mxu0
    %v1428 = vadd.f32 %v1387, %v1427
    %1429 = vmatmul.f32.gmra.mxu0 %v1346
    %v1430 = vpop.f32.mrf.mxu0
    %v1431 = vadd.f32 %v1390, %v1430
    %1432 = vmatmul.f32.gmra.mxu0 %v1349
    %v1433 = vpop.f32.mrf.mxu0
    %v1434 = vadd.f32 %v1393, %v1433
    %1435 = vdwg.mxu0
    %v1436 = vld [vmem:[%s7] sm:$0xff]
    %v1437 = vld [vmem:[%s7 + $0x8] sm:$0xff]
    %v1438 = vld [vmem:[%s7 + $0x10] sm:$0xff]
    %v1439 = vld [vmem:[%s7 + $0x18] sm:$0x7f]
    %vm1440 = vcmask 523264
    %v1442 = vsel %vm1440, %v1436, 0
    %v1445 = vsel %vm1440, %v1437, 0
    %v1448 = vsel %vm1440, %v1438, 0
    %v1451 = vsel %vm1440, %v1439, 0
    %1453 = vmatpush.msra.mxu0 0.0
    %1454 = vmatpush.msra.mxu0 0.0
    %1455 = vmatpush.msra.mxu0 0.0
    %1456 = vmatpush.msra.mxu0 0.0
    %1457 = vmatpush.msra.mxu0 0.0
    %1458 = vmatpush.msra.mxu0 0.0
    %1459 = vmatpush.msra.mxu0 0.0
    %1460 = vmatpush.msra.mxu0 0.0
    %1461 = vmatpush.msra.mxu0 %v1434
    %1462 = vmatpush.msra.mxu0 %v1431
    %1463 = vmatpush.msra.mxu0 %v1428
    %1464 = vmatpush.msra.mxu0 %v1425
    %1465 = vmatpush.msra.mxu0 %v1422
    %1466 = vmatpush.msra.mxu0 %v1419
    %1467 = vmatpush.msra.mxu0 %v1416
    %1468 = vmatpush.msra.mxu0 %v1413
    %1469 = vmatmul.f32.gmra.mxu0 %v1442
    %v1470 = vpop.f32.mrf.mxu0
    %v1471 = vadd.f32 0.0, %v1470
    %1472 = vmatmul.f32.gmra.mxu0 %v1445
    %v1473 = vpop.f32.mrf.mxu0
    %v1474 = vadd.f32 0.0, %v1473
    %1475 = vmatmul.f32.gmra.mxu0 %v1448
    %v1476 = vpop.f32.mrf.mxu0
    %v1477 = vadd.f32 0.0, %v1476
    %1478 = vmatmul.f32.gmra.mxu0 %v1451
    %v1479 = vpop.f32.mrf.mxu0
    %v1480 = vadd.f32 0.0, %v1479
    %1481 = vdwg.mxu0
    %vm1482 = vcmask 359424
    %1483 = vst.msk [vmem:[%s8] sm:$0xff] %vm1482, %v1471
    %1484 = vst.msk [vmem:[%s8 + $0x8] sm:$0xff] %vm1482, %v1474
    %1485 = vst.msk [vmem:[%s8 + $0x10] sm:$0xff] %vm1482, %v1477
    %vm1486 = vcmask 358400
    %1487 = vst.msk [vmem:[%s8 + $0x18] sm:$0x7f] %vm1486, %v1480
    %1492 = vrot.lane.b32.xlu0 %v1471, 84
    %v1493 = vpop.permute.xlu0 %1492
    %1494 = vrot.lane.b32.xlu0 %v1474, 84
    %v1495 = vpop.permute.xlu0 %1494
    %1496 = vrot.lane.b32.xlu0 %v1477, 84
    %v1497 = vpop.permute.xlu0 %1496
    %1498 = vrot.lane.b32.xlu0 %v1480, 84
    %v1499 = vpop.permute.xlu0 %1498
    %s1504 = scalar_lea.vmem %s8, 32
    %1505 = vst.msk [vmem:[%s1504] sm:$0xff] %vm1482, %v1493
    %1506 = vst.msk [vmem:[%s1504 + $0x8] sm:$0xff] %vm1482, %v1495
    %1507 = vst.msk [vmem:[%s1504 + $0x10] sm:$0xff] %vm1482, %v1497
    %1508 = vst.msk [vmem:[%s1504 + $0x18] sm:$0x7f] %vm1486, %v1499
    // Predicated region
    $region38: #{model_forward.1} parent=1 // pred_check
      _
    $region39: #{model_forward.1} parent=1 // pred_check_branch
      %1510 = sbr.rel (0) target = $region41
    $region40: #{model_forward.1} parent=1 // pred_region
      _
    $region41: #{model_forward.1} parent=1 // pred_fallthru
      _
    // Predicated region
    $region42: #{model_forward.1} parent=1 // pred_check
      _
    $region43: #{model_forward.1} parent=1 // pred_check_branch
      %1512 = sbr.rel (0) target = $region45
    $region44: #{model_forward.1} parent=1 // pred_region
      _
    $region45: #{model_forward.1} parent=1 // pred_fallthru
      _
    %1513 = vsyncpa [#allocation3], 1

</llo_original>
